<compile_context>
chip_gen: v6e
topology: v6e:2x2x1
jax: 0.10.0
libtpu: 0.0.40
codegen_flags: <defaults>
</compile_context>

<pallas_src>
import functools
import math

import jax
import jax.numpy as jnp
from jax.experimental import pallas as pl
from jax.experimental.pallas import tpu as pltpu

EPS = 1e-5  # nn.LayerNorm default


# ---------------------------------------------------------------------------
# Per-generation tuning knobs (VMEM limit, FFN row tile)
# ---------------------------------------------------------------------------

def _vmem_capacity_bytes():
    try:
        return int(pltpu.get_tpu_info().vmem_capacity_bytes)
    except Exception:
        return 64 * 1024 * 1024  # conservative (v7x-sized) fallback


_VMEM_CAP = _vmem_capacity_bytes()
_VMEM_LIMIT = int(_VMEM_CAP * 0.8)            # ~51 MiB on v7x, ~102 MiB on v5e/v6e
_ROW_TILE = 512 if _VMEM_CAP <= 64 * 1024 * 1024 else 1024


def _compiler_params(dim_sem):
    return pltpu.CompilerParams(dimension_semantics=dim_sem,
                                vmem_limit_bytes=_VMEM_LIMIT)


def _resident(shape):
    """BlockSpec for a VMEM-resident constant (weight) block: single-buffered."""
    index_map = lambda *_: (0,) * len(shape)
    buffered = getattr(pl, "Buffered", None)
    if buffered is not None:
        try:
            return pl.BlockSpec(shape, index_map, pipeline_mode=buffered(1))
        except TypeError:   # older jax without pipeline_mode on BlockSpec
            pass
    return pl.BlockSpec(shape, index_map)


def _layernorm(z, g, b):
    mean = jnp.mean(z, axis=-1, keepdims=True)
    var = jnp.mean(jnp.square(z - mean), axis=-1, keepdims=True)
    return (z - mean) * jax.lax.rsqrt(var + EPS) * g + b


# ---------------------------------------------------------------------------
# Kernel 1: fused QKV projection (row-tiled over tokens)
# ---------------------------------------------------------------------------

def _qkv_proj_kernel(x_ref, w_ref, b_ref, qkv_ref):
    x = x_ref[...].astype(jnp.bfloat16)                       # (tile, D) bf16 for the MXU
    acc = jnp.dot(x, w_ref[...], preferred_element_type=jnp.float32) + b_ref[...]
    qkv_ref[...] = acc.astype(qkv_ref.dtype)


def qkv_projection(x2, wqkv, bqkv, *, row_tile):
    N, D = x2.shape
    D3 = wqkv.shape[1]
    tile = N if N <= row_tile else row_tile
    grid = (pl.cdiv(N, tile),)
    return pl.pallas_call(
        _qkv_proj_kernel,
        grid=grid,
        in_specs=[pl.BlockSpec((tile, D), lambda i: (i, 0)),
                  _resident((D, D3)),
                  _resident((1, D3))],
        out_specs=pl.BlockSpec((tile, D3), lambda i: (i, 0)),
        out_shape=jax.ShapeDtypeStruct((N, D3), jnp.bfloat16),
        compiler_params=_compiler_params(("parallel",)),
        cost_estimate=pl.CostEstimate(
            flops=int(2 * N * D * D3),
            transcendentals=0,
            bytes_accessed=int(4 * N * D + 2 * N * D3 + 2 * D * D3 + 4 * D3)),
    )(x2, wqkv, bqkv)


# ---------------------------------------------------------------------------
# Kernel 2: per-(batch, head) attention, grid=(B, H)
# ---------------------------------------------------------------------------

def _attn_core(q_ref, k_ref, v_ref, scale):
    q = q_ref[0, 0] * scale                                   # bf16, scale folded into q
    k = k_ref[0, 0]
    v = v_ref[0, 0]
    # q @ k^T via contraction on Dh (no materialized transpose); bf16 in, f32 accum.
    s = jax.lax.dot_general(q, k, (((1,), (1,)), ((), ())),
                            preferred_element_type=jnp.float32)
    s = s - jnp.max(s, axis=-1, keepdims=True)
    e = jnp.exp(s)
    p = e / jnp.sum(e, axis=-1, keepdims=True)                # exact normalize (stored probs)
    ctx = jnp.dot(p.astype(jnp.bfloat16), v, preferred_element_type=jnp.float32)
    return p, ctx


def _attn_head_kernel(q_ref, k_ref, v_ref, ctx_ref, attn_ref, *, scale):
    p, ctx = _attn_core(q_ref, k_ref, v_ref, scale)
    attn_ref[0, 0] = p.astype(attn_ref.dtype)
    ctx_ref[0, 0] = ctx.astype(ctx_ref.dtype)


def _attn_head_kernel_ctx_only(q_ref, k_ref, v_ref, ctx_ref, *, scale):
    _, ctx = _attn_core(q_ref, k_ref, v_ref, scale)
    ctx_ref[0, 0] = ctx.astype(ctx_ref.dtype)


def attention_heads(q, k, v, *, scale, return_attn=True):
    """q,k,v: [B, H, S, Dh] (bf16) -> (ctx [B,H,S,Dh] bf16, attn [B,H,S,S] bf16 or None)."""
    B, H, S, Dh = q.shape
    qkv_spec = pl.BlockSpec((1, 1, S, Dh), lambda b, h: (b, h, 0, 0))
    ctx_spec = pl.BlockSpec((1, 1, S, Dh), lambda b, h: (b, h, 0, 0))
    ctx_shape = jax.ShapeDtypeStruct((B, H, S, Dh), jnp.bfloat16)

    if return_attn:
        kernel = functools.partial(_attn_head_kernel, scale=scale)
        out_specs = (ctx_spec, pl.BlockSpec((1, 1, S, S), lambda b, h: (b, h, 0, 0)))
        out_shape = (ctx_shape, jax.ShapeDtypeStruct((B, H, S, S), jnp.bfloat16))
    else:
        kernel = functools.partial(_attn_head_kernel_ctx_only, scale=scale)
        out_specs = ctx_spec
        out_shape = ctx_shape

    bytes_accessed = 2 * (4 * B * H * S * Dh + (B * H * S * S if return_attn else 0))
    res = pl.pallas_call(
        kernel,
        grid=(B, H),
        in_specs=[qkv_spec, qkv_spec, qkv_spec],
        out_specs=out_specs,
        out_shape=out_shape,
        compiler_params=_compiler_params(("parallel", "parallel")),
        cost_estimate=pl.CostEstimate(
            flops=int(4 * B * H * S * S * Dh),
            transcendentals=int(B * H * S * S),
            bytes_accessed=int(bytes_accessed)),
    )(q, k, v)
    if return_attn:
        return res
    return res, None


# ---------------------------------------------------------------------------
# Kernel 3: out-proj + residual + norm1 + conv1/ReLU/conv2 + residual + norm2
# ---------------------------------------------------------------------------

def _proj_ffn_ln_kernel(ctx_ref, x_ref, wo_ref, bo_ref, w1_ref, b1_ref, w2_ref,
                        b2_ref, g1_ref, be1_ref, g2_ref, be2_ref, o_ref):
    ctx = ctx_ref[...]                                        # bf16 tile, stays bf16 for MXU
    x = x_ref[...].astype(jnp.float32)
    proj = jnp.dot(ctx, wo_ref[...], preferred_element_type=jnp.float32) + bo_ref[...]
    x1 = _layernorm(x + proj, g1_ref[...], be1_ref[...])      # norm1, f32
    h = jnp.dot(x1.astype(jnp.bfloat16), w1_ref[...],
                preferred_element_type=jnp.float32) + b1_ref[...]
    h = jnp.maximum(h, 0.0)                                   # conv1 (k=1) + ReLU
    y = jnp.dot(h.astype(jnp.bfloat16), w2_ref[...],
                preferred_element_type=jnp.float32) + b2_ref[...]
    o_ref[...] = _layernorm(x1 + y, g2_ref[...], be2_ref[...]).astype(o_ref.dtype)


def proj_ffn_layernorm(ctx2, x2, wo, bo, w1, b1, w2, b2, g1, be1, g2, be2, *, row_tile):
    N, D = x2.shape
    d_ff = w1.shape[1]
    tile = N if N <= row_tile else row_tile
    grid = (pl.cdiv(N, tile),)
    row = lambda shape: pl.BlockSpec(shape, lambda i: (i, 0))
    return pl.pallas_call(
        _proj_ffn_ln_kernel,
        grid=grid,
        in_specs=[row((tile, D)), row((tile, D)),
                  _resident((D, D)), _resident((1, D)),
                  _resident((D, d_ff)), _resident((1, d_ff)),
                  _resident((d_ff, D)), _resident((1, D)),
                  _resident((1, D)), _resident((1, D)),
                  _resident((1, D)), _resident((1, D))],
        out_specs=row((tile, D)),
        out_shape=jax.ShapeDtypeStruct((N, D), x2.dtype),
        compiler_params=_compiler_params(("parallel",)),
        cost_estimate=pl.CostEstimate(
            flops=int(2 * N * D * D + 4 * N * D * d_ff),
            transcendentals=int(2 * N),
            bytes_accessed=int(10 * N * D + 2 * D * D + 4 * D * d_ff + 24 * D + 4 * d_ff)),
    )(ctx2, x2, wo, bo, w1, b1, w2, b2, g1, be1, g2, be2)


# ---------------------------------------------------------------------------
# EncoderLayer forward
# ---------------------------------------------------------------------------

def encoder_layer_forward(x, p, n_heads, *, return_attn=True, row_tile=_ROW_TILE):
    """x: [B, S, D] -> (out [B, S, D], attn [B, H, S, S] bf16 or None)."""
    B, S, D = x.shape
    H = n_heads
    Dh = D // H
    N = B * S
    x2 = x.reshape(N, D)

    # K1: fused QKV projection over tokens.
    qkv = qkv_projection(x2, p["wqkv"], p["bqkv"], row_tile=row_tile)       # [N, 3D] bf16

    # Head split (one cheap XLA-level copy) so K2 blocks are lane-dense per (b, h).
    qkv = qkv.reshape(B, S, 3, H, Dh).transpose(2, 0, 3, 1, 4)              # [3,B,H,S,Dh]
    q, k, v = qkv[0], qkv[1], qkv[2]

    # K2: per-(batch, head) attention.
    ctx, attn = attention_heads(q, k, v, scale=1.0 / math.sqrt(Dh),
                                return_attn=return_attn)                    # bf16
    ctx2 = ctx.transpose(0, 2, 1, 3).reshape(N, D)                          # [N, D] bf16

    # K3: out-proj -> +res -> norm1 -> FFN -> +res -> norm2 (dropout == identity, eval).
    out = proj_ffn_layernorm(ctx2, x2, p["wo"], p["bo"], p["w1"], p["b1"],
                             p["w2"], p["b2"], p["g1"], p["beta1"],
                             p["g2"], p["beta2"], row_tile=row_tile)
    return out.reshape(B, S, D), attn


# ---------------------------------------------------------------------------
# Deterministic parameter init (weights stored bf16, biases / LN params f32)
# ---------------------------------------------------------------------------

def init_params(key, d_model, d_ff):
    ks = jax.random.split(key, 4)
    scl = 0.02
    f32 = jnp.float32

    def mat(k, shape):
        return (scl * jax.random.normal(k, shape, dtype=f32)).astype(jnp.bfloat16)

    return {
        # fused q/k/v projection (nn.Linear weights stored pre-transposed: [in, out])
        "wqkv": mat(ks[0], (d_model, 3 * d_model)),
        "bqkv": jnp.zeros((1, 3 * d_model), f32),
        "wo": mat(ks[1], (d_model, d_model)), "bo": jnp.zeros((1, d_model), f32),
        # conv1 / conv2 (kernel_size=1) as dense: [in, out]
        "w1": mat(ks[2], (d_model, d_ff)),    "b1": jnp.zeros((1, d_ff), f32),
        "w2": mat(ks[3], (d_ff, d_model)),    "b2": jnp.zeros((1, d_model), f32),
        # layer norms
        "g1": jnp.ones((1, d_model), f32),    "beta1": jnp.zeros((1, d_model), f32),
        "g2": jnp.ones((1, d_model), f32),    "beta2": jnp.zeros((1, d_model), f32),
    }


# ---------------------------------------------------------------------------
# Pure-JAX reference (f32) for correctness checking
# ---------------------------------------------------------------------------

def encoder_layer_reference(x, p, n_heads):
    B, S, D = x.shape
    H, Dh = n_heads, D // n_heads
    with jax.default_matmul_precision("highest"):
        xf = x.astype(jnp.float32).reshape(B * S, D)
        qkv = xf @ p["wqkv"].astype(jnp.float32) + p["bqkv"]
        qkv = qkv.reshape(B, S, 3, H, Dh).transpose(2, 0, 3, 1, 4)
        q, k, v = qkv[0], qkv[1], qkv[2]
        s = jnp.einsum("bhqd,bhkd->bhqk", q, k) / math.sqrt(Dh)
        attn = jax.nn.softmax(s, axis=-1)
        ctx = jnp.einsum("bhqk,bhkd->bhqd", attn, v)
        ctx = ctx.transpose(0, 2, 1, 3).reshape(B * S, D)
        proj = ctx @ p["wo"].astype(jnp.float32) + p["bo"]
        x1 = _layernorm(xf + proj, p["g1"], p["beta1"])
        h = jnp.maximum(x1 @ p["w1"].astype(jnp.float32) + p["b1"], 0.0)
        y = h @ p["w2"].astype(jnp.float32) + p["b2"]
        out = _layernorm(x1 + y, p["g2"], p["beta2"])
    return out.reshape(B, S, D), attn


if __name__ == "__main__":
    B, S, d_model, n_heads = 2, 8, 32, 4
    d_ff = 4 * d_model  # PyTorch default d_ff = 4 * d_model

    key = jax.random.PRNGKey(0)
    k_x, k_p = jax.random.split(key)
    x = jax.random.normal(k_x, (B, S, d_model), dtype=jnp.float32)
    params = init_params(k_p, d_model, d_ff)

    fwd = jax.jit(functools.partial(encoder_layer_forward, n_heads=n_heads,
                                    return_attn=True))
    out, attn = fwd(x, params)
    out, attn = jax.block_until_ready((out, attn))

    assert out.shape == (B, S, d_model) and out.dtype == x.dtype
    assert attn.shape == (B, n_heads, S, S)
    assert bool(jnp.all(jnp.isfinite(out))) and bool(jnp.all(jnp.isfinite(attn)))

    ref_out, ref_attn = encoder_layer_reference(x, params, n_heads)
    assert float(jnp.max(jnp.abs(out - ref_out))) < 5e-2
    assert float(jnp.max(jnp.abs(attn.astype(jnp.float32) - ref_attn))) < 2e-2

    print("KERNEL_OK")
</pallas_src>

<mosaic_0001>
module attributes {stable_mosaic.version = 11 : i64} {
  func.func @_qkv_proj_kernel(%arg0: i32, %arg1: memref<16x32xf32, #tpu.memory_space<vmem>>, %arg2: memref<32x96xbf16, #tpu.memory_space<vmem>>, %arg3: memref<1x96xf32, #tpu.memory_space<vmem>>, %arg4: memref<16x96xbf16, #tpu.memory_space<vmem>>) attributes {dimension_semantics = [#tpu.dimension_semantics<parallel>], iteration_bounds = array<i64: 1>, scalar_prefetch = 0 : i64, scratch_operands = 0 : i64, tpu.core_type = #tpu.core_type<tc>, window_params = [{transform_indices = @transform_0, window_bounds = array<i64: 16, 32>}, {pipeline_mode = #tpu.pipeline_mode<synchronous>, transform_indices = @transform_1, window_bounds = array<i64: 32, 96>}, {pipeline_mode = #tpu.pipeline_mode<synchronous>, transform_indices = @transform_2, window_bounds = array<i64: 1, 96>}, {transform_indices = @transform_3, window_bounds = array<i64: 16, 96>}]} {
    %c0 = arith.constant 0 : index
    %c0_0 = arith.constant 0 : index
    %0 = vector.load %arg1[%c0, %c0_0] : memref<16x32xf32, #tpu.memory_space<vmem>>, vector<16x32xf32>
    %1 = arith.truncf %0 : vector<16x32xf32> to vector<16x32xbf16>
    %c0_1 = arith.constant 0 : index
    %c0_2 = arith.constant 0 : index
    %2 = vector.load %arg2[%c0_1, %c0_2] : memref<32x96xbf16, #tpu.memory_space<vmem>>, vector<32x96xbf16>
    %cst = arith.constant dense<0.000000e+00> : vector<16x96xf32>
    %3 = tpu.matmul %1, %2, %cst {dimension_numbers = #tpu.dot_dimension_numbers<[1], [0], [0], [1], [0, 0, 1, 1], [], []>} : vector<16x32xbf16>, vector<32x96xbf16>, vector<16x96xf32> -> vector<16x96xf32>
    %c0_3 = arith.constant 0 : index
    %c0_4 = arith.constant 0 : index
    %4 = vector.load %arg3[%c0_3, %c0_4] : memref<1x96xf32, #tpu.memory_space<vmem>>, vector<1x96xf32>
    %5 = vector.broadcast %4 : vector<1x96xf32> to vector<16x96xf32>
    %6 = arith.addf %3, %5 : vector<16x96xf32>
    %7 = arith.truncf %6 : vector<16x96xf32> to vector<16x96xbf16>
    %c0_5 = arith.constant 0 : index
    %c0_6 = arith.constant 0 : index
    %8 = vector.load %arg4[%c0_5, %c0_6] : memref<16x96xbf16, #tpu.memory_space<vmem>>, vector<16x96xbf16>
    tpu.vector_store %arg4[%c0_5, %c0_6], %7 {strides = array<i32>} : memref<16x96xbf16, #tpu.memory_space<vmem>>, vector<16x96xbf16>,
    return
  }
  func.func @transform_0(%arg0: i32) -> (i32, i32) {
    %c0_i32 = arith.constant 0 : i32
    %c0_i32_0 = arith.constant 0 : i32
    return %arg0, %c0_i32 : i32, i32
  }
  func.func @transform_1(%arg0: i32) -> (i32, i32) {
    %c0_i32 = arith.constant 0 : i32
    %c0_i32_0 = arith.constant 0 : i32
    %c0_i32_1 = arith.constant 0 : i32
    return %c0_i32, %c0_i32_0 : i32, i32
  }
  func.func @transform_2(%arg0: i32) -> (i32, i32) {
    %c0_i32 = arith.constant 0 : i32
    %c0_i32_0 = arith.constant 0 : i32
    %c0_i32_1 = arith.constant 0 : i32
    return %c0_i32, %c0_i32_0 : i32, i32
  }
  func.func @transform_3(%arg0: i32) -> (i32, i32) {
    %c0_i32 = arith.constant 0 : i32
    %c0_i32_0 = arith.constant 0 : i32
    return %arg0, %c0_i32 : i32, i32
  }
}

module attributes {stable_mosaic.version = 11 : i64} {
  func.func @_attn_head_kernel(%arg0: i32, %arg1: i32, %arg2: memref<1x1x8x8xbf16, #tpu.memory_space<vmem>>, %arg3: memref<1x1x8x8xbf16, #tpu.memory_space<vmem>>, %arg4: memref<1x1x8x8xbf16, #tpu.memory_space<vmem>>, %arg5: memref<1x1x8x8xbf16, #tpu.memory_space<vmem>>, %arg6: memref<1x1x8x8xbf16, #tpu.memory_space<vmem>>) attributes {dimension_semantics = [#tpu.dimension_semantics<parallel>, #tpu.dimension_semantics<parallel>], iteration_bounds = array<i64: 2, 4>, scalar_prefetch = 0 : i64, scratch_operands = 0 : i64, tpu.core_type = #tpu.core_type<tc>, window_params = [{transform_indices = @transform_0, window_bounds = array<i64: 1, 1, 8, 8>}, {transform_indices = @transform_1, window_bounds = array<i64: 1, 1, 8, 8>}, {transform_indices = @transform_2, window_bounds = array<i64: 1, 1, 8, 8>}, {transform_indices = @transform_3, window_bounds = array<i64: 1, 1, 8, 8>}, {transform_indices = @transform_4, window_bounds = array<i64: 1, 1, 8, 8>}]} {
    %c0 = arith.constant 0 : index
    %c0_0 = arith.constant 0 : index
    %c0_1 = arith.constant 0 : index
    %c0_2 = arith.constant 0 : index
    %0 = vector.load %arg2[%c0, %c0_0, %c0_1, %c0_2] : memref<1x1x8x8xbf16, #tpu.memory_space<vmem>>, vector<1x1x8x8xbf16>
    %1 = vector.shape_cast %0 : vector<1x1x8x8xbf16> to vector<8x8xbf16>
    %cst = arith.constant 3.535160e-01 : bf16
    %2 = vector.broadcast %cst : bf16 to vector<8x8xbf16>
    %3 = arith.mulf %1, %2 : vector<8x8xbf16>
    %c0_3 = arith.constant 0 : index
    %c0_4 = arith.constant 0 : index
    %c0_5 = arith.constant 0 : index
    %c0_6 = arith.constant 0 : index
    %4 = vector.load %arg3[%c0_3, %c0_4, %c0_5, %c0_6] : memref<1x1x8x8xbf16, #tpu.memory_space<vmem>>, vector<1x1x8x8xbf16>
    %5 = vector.shape_cast %4 : vector<1x1x8x8xbf16> to vector<8x8xbf16>
    %c0_7 = arith.constant 0 : index
    %c0_8 = arith.constant 0 : index
    %c0_9 = arith.constant 0 : index
    %c0_10 = arith.constant 0 : index
    %6 = vector.load %arg4[%c0_7, %c0_8, %c0_9, %c0_10] : memref<1x1x8x8xbf16, #tpu.memory_space<vmem>>, vector<1x1x8x8xbf16>
    %7 = vector.shape_cast %6 : vector<1x1x8x8xbf16> to vector<8x8xbf16>
    %cst_11 = arith.constant dense<0.000000e+00> : vector<8x8xf32>
    %8 = tpu.matmul %3, %5, %cst_11 {dimension_numbers = #tpu.dot_dimension_numbers<[1], [1], [0], [0], [0, 0, 1, 0], [], []>} : vector<8x8xbf16>, vector<8x8xbf16>, vector<8x8xf32> -> vector<8x8xf32>
    %cst_12 = arith.constant dense<0xFF800000> : vector<8xf32>
    %9 = vector.multi_reduction <maximumf>, %8, %cst_12 [1] : vector<8x8xf32> to vector<8xf32>
    %10 = vector.shape_cast %9 : vector<8xf32> to vector<8x1xf32>
    %11 = vector.broadcast %10 : vector<8x1xf32> to vector<8x8xf32>
    %12 = arith.subf %8, %11 : vector<8x8xf32>
    %13 = math.exp %12 : vector<8x8xf32>
    %cst_13 = arith.constant dense<0.000000e+00> : vector<8xf32>
    %14 = vector.multi_reduction <add>, %13, %cst_13 [1] : vector<8x8xf32> to vector<8xf32>
    %15 = vector.shape_cast %14 : vector<8xf32> to vector<8x1xf32>
    %16 = vector.broadcast %15 : vector<8x1xf32> to vector<8x8xf32>
    %17 = arith.divf %13, %16 : vector<8x8xf32>
    %18 = arith.truncf %17 : vector<8x8xf32> to vector<8x8xbf16>
    %cst_14 = arith.constant dense<0.000000e+00> : vector<8x8xf32>
    %19 = tpu.matmul %18, %7, %cst_14 {dimension_numbers = #tpu.dot_dimension_numbers<[1], [0], [0], [1], [0, 0, 1, 1], [], []>} : vector<8x8xbf16>, vector<8x8xbf16>, vector<8x8xf32> -> vector<8x8xf32>
    %20 = arith.truncf %17 : vector<8x8xf32> to vector<8x8xbf16>
    %c0_15 = arith.constant 0 : index
    %c0_16 = arith.constant 0 : index
    %c0_17 = arith.constant 0 : index
    %c0_18 = arith.constant 0 : index
    %21 = vector.load %arg6[%c0_15, %c0_16, %c0_17, %c0_18] : memref<1x1x8x8xbf16, #tpu.memory_space<vmem>>, vector<1x1x8x8xbf16>
    %22 = vector.shape_cast %21 : vector<1x1x8x8xbf16> to vector<8x8xbf16>
    %23 = vector.shape_cast %20 : vector<8x8xbf16> to vector<1x1x8x8xbf16>
    tpu.vector_store %arg6[%c0_15, %c0_16, %c0_17, %c0_18], %23 {strides = array<i32>} : memref<1x1x8x8xbf16, #tpu.memory_space<vmem>>, vector<1x1x8x8xbf16>,
    %24 = arith.truncf %19 : vector<8x8xf32> to vector<8x8xbf16>
    %c0_19 = arith.constant 0 : index
    %c0_20 = arith.constant 0 : index
    %c0_21 = arith.constant 0 : index
    %c0_22 = arith.constant 0 : index
    %25 = vector.load %arg5[%c0_19, %c0_20, %c0_21, %c0_22] : memref<1x1x8x8xbf16, #tpu.memory_space<vmem>>, vector<1x1x8x8xbf16>
    %26 = vector.shape_cast %25 : vector<1x1x8x8xbf16> to vector<8x8xbf16>
    %27 = vector.shape_cast %24 : vector<8x8xbf16> to vector<1x1x8x8xbf16>
    tpu.vector_store %arg5[%c0_19, %c0_20, %c0_21, %c0_22], %27 {strides = array<i32>} : memref<1x1x8x8xbf16, #tpu.memory_space<vmem>>, vector<1x1x8x8xbf16>,
    return
  }
  func.func @transform_0(%arg0: i32, %arg1: i32) -> (i32, i32, i32, i32) {
    %c0_i32 = arith.constant 0 : i32
    %c0_i32_0 = arith.constant 0 : i32
    %c0_i32_1 = arith.constant 0 : i32
    return %arg0, %arg1, %c0_i32, %c0_i32_0 : i32, i32, i32, i32
  }
  func.func @transform_1(%arg0: i32, %arg1: i32) -> (i32, i32, i32, i32) {
    %c0_i32 = arith.constant 0 : i32
    %c0_i32_0 = arith.constant 0 : i32
    %c0_i32_1 = arith.constant 0 : i32
    return %arg0, %arg1, %c0_i32, %c0_i32_0 : i32, i32, i32, i32
  }
  func.func @transform_2(%arg0: i32, %arg1: i32) -> (i32, i32, i32, i32) {
    %c0_i32 = arith.constant 0 : i32
    %c0_i32_0 = arith.constant 0 : i32
    %c0_i32_1 = arith.constant 0 : i32
    return %arg0, %arg1, %c0_i32, %c0_i32_0 : i32, i32, i32, i32
  }
  func.func @transform_3(%arg0: i32, %arg1: i32) -> (i32, i32, i32, i32) {
    %c0_i32 = arith.constant 0 : i32
    %c0_i32_0 = arith.constant 0 : i32
    %c0_i32_1 = arith.constant 0 : i32
    return %arg0, %arg1, %c0_i32, %c0_i32_0 : i32, i32, i32, i32
  }
  func.func @transform_4(%arg0: i32, %arg1: i32) -> (i32, i32, i32, i32) {
    %c0_i32 = arith.constant 0 : i32
    %c0_i32_0 = arith.constant 0 : i32
    %c0_i32_1 = arith.constant 0 : i32
    return %arg0, %arg1, %c0_i32, %c0_i32_0 : i32, i32, i32, i32
  }
}

module attributes {stable_mosaic.version = 11 : i64} {
  func.func @_proj_ffn_ln_kernel(%arg0: i32, %arg1: memref<16x32xbf16, #tpu.memory_space<vmem>>, %arg2: memref<16x32xf32, #tpu.memory_space<vmem>>, %arg3: memref<32x32xbf16, #tpu.memory_space<vmem>>, %arg4: memref<1x32xf32, #tpu.memory_space<vmem>>, %arg5: memref<32x128xbf16, #tpu.memory_space<vmem>>, %arg6: memref<1x128xf32, #tpu.memory_space<vmem>>, %arg7: memref<128x32xbf16, #tpu.memory_space<vmem>>, %arg8: memref<1x32xf32, #tpu.memory_space<vmem>>, %arg9: memref<1x32xf32, #tpu.memory_space<vmem>>, %arg10: memref<1x32xf32, #tpu.memory_space<vmem>>, %arg11: memref<1x32xf32, #tpu.memory_space<vmem>>, %arg12: memref<1x32xf32, #tpu.memory_space<vmem>>, %arg13: memref<16x32xf32, #tpu.memory_space<vmem>>) attributes {dimension_semantics = [#tpu.dimension_semantics<parallel>], iteration_bounds = array<i64: 1>, scalar_prefetch = 0 : i64, scratch_operands = 0 : i64, tpu.core_type = #tpu.core_type<tc>, window_params = [{transform_indices = @transform_0, window_bounds = array<i64: 16, 32>}, {transform_indices = @transform_1, window_bounds = array<i64: 16, 32>}, {pipeline_mode = #tpu.pipeline_mode<synchronous>, transform_indices = @transform_2, window_bounds = array<i64: 32, 32>}, {pipeline_mode = #tpu.pipeline_mode<synchronous>, transform_indices = @transform_3, window_bounds = array<i64: 1, 32>}, {pipeline_mode = #tpu.pipeline_mode<synchronous>, transform_indices = @transform_4, window_bounds = array<i64: 32, 128>}, {pipeline_mode = #tpu.pipeline_mode<synchronous>, transform_indices = @transform_5, window_bounds = array<i64: 1, 128>}, {pipeline_mode = #tpu.pipeline_mode<synchronous>, transform_indices = @transform_6, window_bounds = array<i64: 128, 32>}, {pipeline_mode = #tpu.pipeline_mode<synchronous>, transform_indices = @transform_7, window_bounds = array<i64: 1, 32>}, {pipeline_mode = #tpu.pipeline_mode<synchronous>, transform_indices = @transform_8, window_bounds = array<i64: 1, 32>}, {pipeline_mode = #tpu.pipeline_mode<synchronous>, transform_indices = @transform_9, window_bounds = array<i64: 1, 32>}, {pipeline_mode = #tpu.pipeline_mode<synchronous>, transform_indices = @transform_10, window_bounds = array<i64: 1, 32>}, {pipeline_mode = #tpu.pipeline_mode<synchronous>, transform_indices = @transform_11, window_bounds = array<i64: 1, 32>}, {transform_indices = @transform_12, window_bounds = array<i64: 16, 32>}]} {
    %c0 = arith.constant 0 : index
    %c0_0 = arith.constant 0 : index
    %0 = vector.load %arg1[%c0, %c0_0] : memref<16x32xbf16, #tpu.memory_space<vmem>>, vector<16x32xbf16>
    %c0_1 = arith.constant 0 : index
    %c0_2 = arith.constant 0 : index
    %1 = vector.load %arg2[%c0_1, %c0_2] : memref<16x32xf32, #tpu.memory_space<vmem>>, vector<16x32xf32>
    %c0_3 = arith.constant 0 : index
    %c0_4 = arith.constant 0 : index
    %2 = vector.load %arg3[%c0_3, %c0_4] : memref<32x32xbf16, #tpu.memory_space<vmem>>, vector<32x32xbf16>
    %cst = arith.constant dense<0.000000e+00> : vector<16x32xf32>
    %3 = tpu.matmul %0, %2, %cst {dimension_numbers = #tpu.dot_dimension_numbers<[1], [0], [0], [1], [0, 0, 1, 1], [], []>} : vector<16x32xbf16>, vector<32x32xbf16>, vector<16x32xf32> -> vector<16x32xf32>
    %c0_5 = arith.constant 0 : index
    %c0_6 = arith.constant 0 : index
    %4 = vector.load %arg4[%c0_5, %c0_6] : memref<1x32xf32, #tpu.memory_space<vmem>>, vector<1x32xf32>
    %5 = vector.broadcast %4 : vector<1x32xf32> to vector<16x32xf32>
    %6 = arith.addf %3, %5 : vector<16x32xf32>
    %7 = arith.addf %1, %6 : vector<16x32xf32>
    %c0_7 = arith.constant 0 : index
    %c0_8 = arith.constant 0 : index
    %8 = vector.load %arg9[%c0_7, %c0_8] : memref<1x32xf32, #tpu.memory_space<vmem>>, vector<1x32xf32>
    %c0_9 = arith.constant 0 : index
    %c0_10 = arith.constant 0 : index
    %9 = vector.load %arg10[%c0_9, %c0_10] : memref<1x32xf32, #tpu.memory_space<vmem>>, vector<1x32xf32>
    %cst_11 = arith.constant dense<0.000000e+00> : vector<16xf32>
    %10 = vector.multi_reduction <add>, %7, %cst_11 [1] : vector<16x32xf32> to vector<16xf32>
    %11 = vector.shape_cast %10 : vector<16xf32> to vector<16x1xf32>
    %cst_12 = arith.constant 3.200000e+01 : f32
    %12 = vector.broadcast %cst_12 : f32 to vector<16x1xf32>
    %13 = arith.divf %11, %12 : vector<16x1xf32>
    %14 = vector.broadcast %13 : vector<16x1xf32> to vector<16x32xf32>
    %15 = arith.subf %7, %14 : vector<16x32xf32>
    %16 = arith.mulf %15, %15 : vector<16x32xf32>
    %cst_13 = arith.constant dense<0.000000e+00> : vector<16xf32>
    %17 = vector.multi_reduction <add>, %16, %cst_13 [1] : vector<16x32xf32> to vector<16xf32>
    %18 = vector.shape_cast %17 : vector<16xf32> to vector<16x1xf32>
    %cst_14 = arith.constant 3.200000e+01 : f32
    %19 = vector.broadcast %cst_14 : f32 to vector<16x1xf32>
    %20 = arith.divf %18, %19 : vector<16x1xf32>
    %21 = vector.broadcast %13 : vector<16x1xf32> to vector<16x32xf32>
    %22 = arith.subf %7, %21 : vector<16x32xf32>
    %cst_15 = arith.constant 9.99999974E-6 : f32
    %23 = vector.broadcast %cst_15 : f32 to vector<16x1xf32>
    %24 = arith.addf %20, %23 : vector<16x1xf32>
    %25 = math.rsqrt %24 : vector<16x1xf32>
    %26 = vector.broadcast %25 : vector<16x1xf32> to vector<16x32xf32>
    %27 = arith.mulf %22, %26 : vector<16x32xf32>
    %28 = vector.broadcast %8 : vector<1x32xf32> to vector<16x32xf32>
    %29 = arith.mulf %27, %28 : vector<16x32xf32>
    %30 = vector.broadcast %9 : vector<1x32xf32> to vector<16x32xf32>
    %31 = arith.addf %29, %30 : vector<16x32xf32>
    %32 = arith.truncf %31 : vector<16x32xf32> to vector<16x32xbf16>
    %c0_16 = arith.constant 0 : index
    %c0_17 = arith.constant 0 : index
    %33 = vector.load %arg5[%c0_16, %c0_17] : memref<32x128xbf16, #tpu.memory_space<vmem>>, vector<32x128xbf16>
    %cst_18 = arith.constant dense<0.000000e+00> : vector<16x128xf32>
    %34 = tpu.matmul %32, %33, %cst_18 {dimension_numbers = #tpu.dot_dimension_numbers<[1], [0], [0], [1], [0, 0, 1, 1], [], []>} : vector<16x32xbf16>, vector<32x128xbf16>, vector<16x128xf32> -> vector<16x128xf32>
    %c0_19 = arith.constant 0 : index
    %c0_20 = arith.constant 0 : index
    %35 = vector.load %arg6[%c0_19, %c0_20] : memref<1x128xf32, #tpu.memory_space<vmem>>, vector<1x128xf32>
    %36 = vector.broadcast %35 : vector<1x128xf32> to vector<16x128xf32>
    %37 = arith.addf %34, %36 : vector<16x128xf32>
    %cst_21 = arith.constant 0.000000e+00 : f32
    %38 = vector.broadcast %cst_21 : f32 to vector<16x128xf32>
    %39 = arith.maximumf %37, %38 : vector<16x128xf32>
    %40 = arith.truncf %39 : vector<16x128xf32> to vector<16x128xbf16>
    %c0_22 = arith.constant 0 : index
    %c0_23 = arith.constant 0 : index
    %41 = vector.load %arg7[%c0_22, %c0_23] : memref<128x32xbf16, #tpu.memory_space<vmem>>, vector<128x32xbf16>
    %cst_24 = arith.constant dense<0.000000e+00> : vector<16x32xf32>
    %42 = tpu.matmul %40, %41, %cst_24 {dimension_numbers = #tpu.dot_dimension_numbers<[1], [0], [0], [1], [0, 0, 1, 1], [], []>} : vector<16x128xbf16>, vector<128x32xbf16>, vector<16x32xf32> -> vector<16x32xf32>
    %c0_25 = arith.constant 0 : index
    %c0_26 = arith.constant 0 : index
    %43 = vector.load %arg8[%c0_25, %c0_26] : memref<1x32xf32, #tpu.memory_space<vmem>>, vector<1x32xf32>
    %44 = vector.broadcast %43 : vector<1x32xf32> to vector<16x32xf32>
    %45 = arith.addf %42, %44 : vector<16x32xf32>
    %46 = arith.addf %31, %45 : vector<16x32xf32>
    %c0_27 = arith.constant 0 : index
    %c0_28 = arith.constant 0 : index
    %47 = vector.load %arg11[%c0_27, %c0_28] : memref<1x32xf32, #tpu.memory_space<vmem>>, vector<1x32xf32>
    %c0_29 = arith.constant 0 : index
    %c0_30 = arith.constant 0 : index
    %48 = vector.load %arg12[%c0_29, %c0_30] : memref<1x32xf32, #tpu.memory_space<vmem>>, vector<1x32xf32>
    %cst_31 = arith.constant dense<0.000000e+00> : vector<16xf32>
    %49 = vector.multi_reduction <add>, %46, %cst_31 [1] : vector<16x32xf32> to vector<16xf32>
    %50 = vector.shape_cast %49 : vector<16xf32> to vector<16x1xf32>
    %cst_32 = arith.constant 3.200000e+01 : f32
    %51 = vector.broadcast %cst_32 : f32 to vector<16x1xf32>
    %52 = arith.divf %50, %51 : vector<16x1xf32>
    %53 = vector.broadcast %52 : vector<16x1xf32> to vector<16x32xf32>
    %54 = arith.subf %46, %53 : vector<16x32xf32>
    %55 = arith.mulf %54, %54 : vector<16x32xf32>
    %cst_33 = arith.constant dense<0.000000e+00> : vector<16xf32>
    %56 = vector.multi_reduction <add>, %55, %cst_33 [1] : vector<16x32xf32> to vector<16xf32>
    %57 = vector.shape_cast %56 : vector<16xf32> to vector<16x1xf32>
    %cst_34 = arith.constant 3.200000e+01 : f32
    %58 = vector.broadcast %cst_34 : f32 to vector<16x1xf32>
    %59 = arith.divf %57, %58 : vector<16x1xf32>
    %60 = vector.broadcast %52 : vector<16x1xf32> to vector<16x32xf32>
    %61 = arith.subf %46, %60 : vector<16x32xf32>
    %cst_35 = arith.constant 9.99999974E-6 : f32
    %62 = vector.broadcast %cst_35 : f32 to vector<16x1xf32>
    %63 = arith.addf %59, %62 : vector<16x1xf32>
    %64 = math.rsqrt %63 : vector<16x1xf32>
    %65 = vector.broadcast %64 : vector<16x1xf32> to vector<16x32xf32>
    %66 = arith.mulf %61, %65 : vector<16x32xf32>
    %67 = vector.broadcast %47 : vector<1x32xf32> to vector<16x32xf32>
    %68 = arith.mulf %66, %67 : vector<16x32xf32>
    %69 = vector.broadcast %48 : vector<1x32xf32> to vector<16x32xf32>
    %70 = arith.addf %68, %69 : vector<16x32xf32>
    %c0_36 = arith.constant 0 : index
    %c0_37 = arith.constant 0 : index
    %71 = vector.load %arg13[%c0_36, %c0_37] : memref<16x32xf32, #tpu.memory_space<vmem>>, vector<16x32xf32>
    tpu.vector_store %arg13[%c0_36, %c0_37], %70 {strides = array<i32>} : memref<16x32xf32, #tpu.memory_space<vmem>>, vector<16x32xf32>,
    return
  }
  func.func @transform_0(%arg0: i32) -> (i32, i32) {
    %c0_i32 = arith.constant 0 : i32
    %c0_i32_0 = arith.constant 0 : i32
    return %arg0, %c0_i32 : i32, i32
  }
  func.func @transform_1(%arg0: i32) -> (i32, i32) {
    %c0_i32 = arith.constant 0 : i32
    %c0_i32_0 = arith.constant 0 : i32
    return %arg0, %c0_i32 : i32, i32
  }
  func.func @transform_2(%arg0: i32) -> (i32, i32) {
    %c0_i32 = arith.constant 0 : i32
    %c0_i32_0 = arith.constant 0 : i32
    %c0_i32_1 = arith.constant 0 : i32
    return %c0_i32, %c0_i32_0 : i32, i32
  }
  func.func @transform_3(%arg0: i32) -> (i32, i32) {
    %c0_i32 = arith.constant 0 : i32
    %c0_i32_0 = arith.constant 0 : i32
    %c0_i32_1 = arith.constant 0 : i32
    return %c0_i32, %c0_i32_0 : i32, i32
  }
  func.func @transform_4(%arg0: i32) -> (i32, i32) {
    %c0_i32 = arith.constant 0 : i32
    %c0_i32_0 = arith.constant 0 : i32
    %c0_i32_1 = arith.constant 0 : i32
    return %c0_i32, %c0_i32_0 : i32, i32
  }
  func.func @transform_5(%arg0: i32) -> (i32, i32) {
    %c0_i32 = arith.constant 0 : i32
    %c0_i32_0 = arith.constant 0 : i32
    %c0_i32_1 = arith.constant 0 : i32
    return %c0_i32, %c0_i32_0 : i32, i32
  }
  func.func @transform_6(%arg0: i32) -> (i32, i32) {
    %c0_i32 = arith.constant 0 : i32
    %c0_i32_0 = arith.constant 0 : i32
    %c0_i32_1 = arith.constant 0 : i32
    return %c0_i32, %c0_i32_0 : i32, i32
  }
  func.func @transform_7(%arg0: i32) -> (i32, i32) {
    %c0_i32 = arith.constant 0 : i32
    %c0_i32_0 = arith.constant 0 : i32
    %c0_i32_1 = arith.constant 0 : i32
    return %c0_i32, %c0_i32_0 : i32, i32
  }
  func.func @transform_8(%arg0: i32) -> (i32, i32) {
    %c0_i32 = arith.constant 0 : i32
    %c0_i32_0 = arith.constant 0 : i32
    %c0_i32_1 = arith.constant 0 : i32
    return %c0_i32, %c0_i32_0 : i32, i32
  }
  func.func @transform_9(%arg0: i32) -> (i32, i32) {
    %c0_i32 = arith.constant 0 : i32
    %c0_i32_0 = arith.constant 0 : i32
    %c0_i32_1 = arith.constant 0 : i32
    return %c0_i32, %c0_i32_0 : i32, i32
  }
  func.func @transform_10(%arg0: i32) -> (i32, i32) {
    %c0_i32 = arith.constant 0 : i32
    %c0_i32_0 = arith.constant 0 : i32
    %c0_i32_1 = arith.constant 0 : i32
    return %c0_i32, %c0_i32_0 : i32, i32
  }
  func.func @transform_11(%arg0: i32) -> (i32, i32) {
    %c0_i32 = arith.constant 0 : i32
    %c0_i32_0 = arith.constant 0 : i32
    %c0_i32_1 = arith.constant 0 : i32
    return %c0_i32, %c0_i32_0 : i32, i32
  }
  func.func @transform_12(%arg0: i32) -> (i32, i32) {
    %c0_i32 = arith.constant 0 : i32
    %c0_i32_0 = arith.constant 0 : i32
    return %arg0, %c0_i32 : i32, i32
  }
}

</mosaic_0001>

<llo_original>
// kernel: encoder_layer_forward.3
$region0: #{encoder_layer_forward.3}
  #allocation0 [shape = 'u32[]', space=smem, size = 0x4, offset = 0x4, fixed_abs, tag = 'smem constant byte address 0x4 - core index']
  #allocation1 [shape = 'u32[144,128]{1,0:T(1,128)}', space=vmem, size = 0x12000, scoped, tag = 'internal scratch']
  %s0 = inlined_call_operand.vmem [shape: f32[16,32], index: 0, kind: input, shape index: {}]
  %s1 = inlined_call_operand.hbm [shape: bf16[32,96], index: 1, kind: input, shape index: {}]
  %s2 = inlined_call_operand.vmem [shape: f32[1,96], index: 2, kind: input, shape index: {}]
  %s3 = inlined_call_operand.vmem [shape: bf16[16,96], index: 3, kind: output, shape index: {}]
  %s4 = sld [smem:[#allocation0]]
  $region26: #{encoder_layer_forward.3} parent=0
    _
  %s6 = ssub.s32 1, %s4
  %s7 = scalar_select 0, %s6, %s4
  $region1: #{encoder_layer_forward.3} parent=0
    #allocation2 [shape = 'u8[8192]{0}', space=vmem, size = 0x2000, scoped, tag = 'input window, operand 1, single buffered']
    #allocation3 [shape = 's32[1]{0}', space=sflag, size = 0x4, scoped, tag = 'scoped memory for encoder_layer_forward.3']
    %8 = vsyncpa [#allocation3], 0
    // Predicated region
    $region2: #{encoder_layer_forward.3} parent=1 // pred_check
      _
    $region3: #{encoder_layer_forward.3} parent=1 // pred_check_branch
      %10 = sbr.rel (0) target = $region5
    $region4: #{encoder_layer_forward.3} parent=1 // pred_region
      _
    $region5: #{encoder_layer_forward.3} parent=1 // pred_fallthru
      _
    // Predicated region
    $region6: #{encoder_layer_forward.3} parent=1 // pred_check
      _
    $region7: #{encoder_layer_forward.3} parent=1 // pred_check_branch
      %12 = sbr.rel (0) target = $region9
    $region8: #{encoder_layer_forward.3} parent=1 // pred_region
      %s14 = ssub.s32 256, 256
      %15 = vsyncadd [#allocation3], %s14
      %s16 = sshll.u32 [#allocation2], 4
      %s17 = int_to_ptr.vmem [resolvable:$true] %s16
      %22 = dma.hbm_to_vmem [thread:$0]  %s1, 256, %s17, [#allocation3], 64, 64, 4
    $region9: #{encoder_layer_forward.3} parent=1 // pred_fallthru
      _
    // Predicated region
    $region10: #{encoder_layer_forward.3} parent=1 // pred_check
      _
    $region11: #{encoder_layer_forward.3} parent=1 // pred_check_branch
      %24 = sbr.rel (0) target = $region13
    $region12: #{encoder_layer_forward.3} parent=1 // pred_region
      _
    $region13: #{encoder_layer_forward.3} parent=1 // pred_fallthru
      _
    // Predicated region
    $region14: #{encoder_layer_forward.3} parent=1 // pred_check
      _
    $region15: #{encoder_layer_forward.3} parent=1 // pred_check_branch
      %26 = sbr.rel (0) target = $region17
    $region16: #{encoder_layer_forward.3} parent=1 // pred_region
      %27 = dma.done [#allocation3], 256
    $region17: #{encoder_layer_forward.3} parent=1 // pred_fallthru
      _
    %v29 = vld [vmem:[%s0] sm:$0xff]
    %v30 = vld [vmem:[%s0 + $0x8] sm:$0xff]
    %v31 = vpack.c.bf16 %v30, %v29
    %v32 = vld [vmem:[#allocation2] sm:$0xf]
    %v33 = vld [vmem:[#allocation2 + $0x4] sm:$0xf]
    %v34 = vld [vmem:[#allocation2 + $0x8] sm:$0xf]
    %v35 = vld [vmem:[#allocation2 + $0xc] sm:$0xf]
    %v36 = vld [vmem:[%s2] sm:$0x1]
    %v38 = vlaneseq
    %v39 = vshrl.u32 %v38, 7
    %v40 = vsub.s32 0, %v39
    %v41 = vrot.slane %v36, %v40
    %v47 = vunpack.c.l.b16 %v32
    %v48 = vunpack.c.l.b16 %v33
    %v49 = vunpack.c.l.b16 %v34
    %v50 = vunpack.c.l.b16 %v35
    %v51 = vpack.c.b16 %v48, %v47
    %v52 = vpack.c.b16 %v50, %v49
    %vm55 = vcmask 261120
    %v57 = vsel %vm55, %v31, 0
    %59 = vmatprep.subr.bf16.mxu0 0
    %60 = vmatpush1.bf16.msra.mxu0 0
    %61 = vmatprep.subr.bf16.mxu0 0
    %62 = vmatpush1.bf16.msra.mxu0 0
    %63 = vmatprep.subr.bf16.mxu0 0
    %64 = vmatpush1.bf16.msra.mxu0 0
    %65 = vmatprep.subr.bf16.mxu0 0
    %66 = vmatpush1.bf16.msra.mxu0 0
    %67 = vmatprep.subr.bf16.mxu0 0
    %68 = vmatpush1.bf16.msra.mxu0 0
    %69 = vmatprep.subr.bf16.mxu0 0
    %70 = vmatpush1.bf16.msra.mxu0 0
    %71 = vmatprep.subr.bf16.mxu0 0
    %72 = vmatpush1.bf16.msra.mxu0 %v52
    %73 = vmatprep.subr.bf16.mxu0 0
    %74 = vmatpush1.bf16.msra.mxu0 %v51
    %75 = vmatprep.subr.bf16.mxu0 0
    %76 = vmatpush2.bf16.msra.mxu0 0
    %77 = vmatprep.subr.bf16.mxu0 0
    %78 = vmatpush2.bf16.msra.mxu0 0
    %79 = vmatprep.subr.bf16.mxu0 0
    %80 = vmatpush2.bf16.msra.mxu0 0
    %81 = vmatprep.subr.bf16.mxu0 0
    %82 = vmatpush2.bf16.msra.mxu0 0
    %83 = vmatprep.subr.bf16.mxu0 0
    %84 = vmatpush2.bf16.msra.mxu0 0
    %85 = vmatprep.subr.bf16.mxu0 0
    %86 = vmatpush2.bf16.msra.mxu0 0
    %87 = vmatprep.subr.bf16.mxu0 0
    %88 = vmatpush2.bf16.msra.mxu0 0
    %89 = vmatprep.subr.bf16.mxu0 0
    %90 = vmatpush2.bf16.msra.mxu0 0
    %91 = vmatprep.mubr.bf16.mxu0 0
    %92 = vmatmul.mubr.bf16.gmra.mxu0 %v57
    %v93 = vpop.f32.mrf.mxu0
    %v94 = vadd.f32 %v41, %v93
    %v95 = vpop.f32.mrf.mxu0
    %v96 = vpop.f32.mrf.mxu0
    %v97 = vadd.f32 %v41, %v96
    %v98 = vpop.f32.mrf.mxu0
    %99 = vdwg.mxu0
    %v100 = vpack.c.bf16 %v97, %v94
    %v102 = vunpack.c.l.b16 %v100
    %v103 = vunpack.c.h.b16 %v100
    %v104 = vpack.c.b16 %v102, %v102
    %v105 = vpack.c.b16 %v103, %v103
    %vm108 = vcmask 781312
    %109 = vst.msk [vmem:[%s3] sm:$0xf] %vm108, %v104
    %110 = vst.msk [vmem:[%s3 + $0x4] sm:$0xf] %vm108, %v105
    // Predicated region
    $region18: #{encoder_layer_forward.3} parent=1 // pred_check
      _
    $region19: #{encoder_layer_forward.3} parent=1 // pred_check_branch
      %112 = sbr.rel (0) target = $region21
    $region20: #{encoder_layer_forward.3} parent=1 // pred_region
      _
    $region21: #{encoder_layer_forward.3} parent=1 // pred_fallthru
      _
    // Predicated region
    $region22: #{encoder_layer_forward.3} parent=1 // pred_check
      _
    $region23: #{encoder_layer_forward.3} parent=1 // pred_check_branch
      %114 = sbr.rel (0) target = $region25
    $region24: #{encoder_layer_forward.3} parent=1 // pred_region
      _
    $region25: #{encoder_layer_forward.3} parent=1 // pred_fallthru
      _
    %115 = vsyncpa [#allocation3], 1

// kernel: encoder_layer_forward.4
$region0: #{encoder_layer_forward.4}
  #allocation0 [shape = 'u32[]', space=smem, size = 0x4, offset = 0x4, fixed_abs, tag = 'smem constant byte address 0x4 - core index']
  #allocation1 [shape = 'u32[144,128]{1,0:T(1,128)}', space=vmem, size = 0x12000, scoped, tag = 'internal scratch']
  %s0 = inlined_call_operand.vmem [shape: bf16[2,4,8,8], index: 0, kind: input, shape index: {}]
  %s1 = inlined_call_operand.vmem [shape: bf16[2,4,8,8], index: 1, kind: input, shape index: {}]
  %s2 = inlined_call_operand.vmem [shape: bf16[2,4,8,8], index: 2, kind: input, shape index: {}]
  %s3 = inlined_call_operand.vmem [shape: bf16[2,4,8,8], index: 3, kind: output, shape index: {0}]
  %s4 = inlined_call_operand.hbm [shape: bf16[2,4,8,8], index: 4, kind: output, shape index: {1}]
  %5 = xla_tuple %s3, %s4
  %s6 = sld [smem:[#allocation0]]
  $region53: #{encoder_layer_forward.4} parent=0
    _
  %s8 = ssub.s32 1, %s6
  %s9 = scalar_select 0, %s8, %s6
  $region1: #{encoder_layer_forward.4} parent=0
    #allocation2 [shape = 'u8[4096]{0}', space=vmem, size = 0x1000, scoped, tag = 'output window, operand 1']
    #allocation3 [shape = 's32[2]{0}', space=sflag, size = 0x8, scoped, tag = 'scoped memory for encoder_layer_forward.4']
    %10 = vsyncpa [#allocation3], 0
    %s11 = scalar_lea.sflag [#allocation3], 1
    %12 = vsyncpa %s11, 0
    loop: start=0, step=1, limit=10
    $region2: #{encoder_layer_forward.4} parent=1 // loop_pre_header
      _
    $region3: #{encoder_layer_forward.4} parent=1 // loop_header
      %s14 = sphi 0, %s18
      %p15 = scmp.ge.s32.totalorder %s14, 10
      %s21 = sphi 0, %s33
      %s22 = sphi 0, %s29
      %s23 = sphi 0, %s21
      %s24 = sphi 0, %s22
      %s25 = sphi 0, %s23
      %s26 = sphi 0, %s24
      %s38 = sphi 0, %s40
      %s41 = sphi 0, %s38
      %s42 = sphi 0, %s41
      %s58 = sphi 0, %s42
      %s66 = sphi 0, %s68
      %s69 = sphi 0, %s66
      %s70 = sphi 0, %s69
      %s86 = sphi 0, %s70
      %s94 = sphi 0, %s96
      %s97 = sphi 0, %s94
      %s98 = sphi 0, %s97
      %s114 = sphi 0, %s98
      %s122 = sphi 0, %s124
      %s125 = sphi 0, %s122
      %s126 = sphi 0, %s125
      %s142 = sphi 0, %s126
      %s150 = sphi 0, %s152
      %s153 = sphi 0, %s150
      %s154 = sphi 0, %s153
      %s170 = sphi 0, %s154
    $region4: #{encoder_layer_forward.4} parent=1 // loop_header_branch
      %17 = sbr.rel (%p15) target = $region8
    $region5: #{encoder_layer_forward.4} parent=1 // loop_body
      %s19 = ssub.s32 %s14, 1
      %s20 = ssub.s32 %s14, 2
      %s27 = sadd.s32 1, %s22
      %p28 = scmp.ge.s32.totalorder %s27, 4
      %s29 = scalar_select %p28, 0, %s27
      %s30 = sadd.s32 1, %s21
      %s31 = scalar_select %p28, %s30, %s21
      %p32 = scmp.ge.s32.totalorder %s31, 2
      %s33 = scalar_select %p32, 0, %s31
      %s34 = ssub.s32 %s21, %s33
      %s35 = ssub.s32 %s22, %s29
      %s36 = sor.u32 %s34, %s35
      %p37 = scmp.eq.s32.totalorder %s36, 0
      %s39 = sadd.s32 %s38, 1
      %s40 = scalar_select %p37, %s38, %s39
      %p43 = pneg %p37
      %p44 = scmp.eq.s32.totalorder %s14, 7
      %p45 = por %p43, %p44
      %p46 = scmp.ne.s32.totalorder %s38, %s41
      %p47 = scmp.eq.s32.totalorder %s14, 0
      %p48 = por %p46, %p47
      %p49 = scmp.ne.s32.totalorder %s38, %s41
      %p50 = scmp.eq.s32.totalorder %s19, 7
      %p51 = por %p49, %p50
      %p52 = scmp.ne.s32.totalorder %s41, %s42
      %p53 = scmp.eq.s32.totalorder %s19, 0
      %p54 = por %p52, %p53
      %p55 = scmp.ne.s32.totalorder %s41, %s42
      %p56 = scmp.eq.s32.totalorder %s20, 7
      %p57 = por %p55, %p56
      %p59 = scmp.ne.s32.totalorder %s42, %s58
      %p60 = scmp.eq.s32.totalorder %s20, 0
      %p61 = por %p59, %p60
      %s62 = ssub.s32 %s21, %s33
      %s63 = ssub.s32 %s22, %s29
      %s64 = sor.u32 %s62, %s63
      %p65 = scmp.eq.s32.totalorder %s64, 0
      %s67 = sadd.s32 %s66, 1
      %s68 = scalar_select %p65, %s66, %s67
      %p71 = pneg %p65
      %p72 = scmp.eq.s32.totalorder %s14, 7
      %p73 = por %p71, %p72
      %p74 = scmp.ne.s32.totalorder %s66, %s69
      %p75 = scmp.eq.s32.totalorder %s14, 0
      %p76 = por %p74, %p75
      %p77 = scmp.ne.s32.totalorder %s66, %s69
      %p78 = scmp.eq.s32.totalorder %s19, 7
      %p79 = por %p77, %p78
      %p80 = scmp.ne.s32.totalorder %s69, %s70
      %p81 = scmp.eq.s32.totalorder %s19, 0
      %p82 = por %p80, %p81
      %p83 = scmp.ne.s32.totalorder %s69, %s70
      %p84 = scmp.eq.s32.totalorder %s20, 7
      %p85 = por %p83, %p84
      %p87 = scmp.ne.s32.totalorder %s70, %s86
      %p88 = scmp.eq.s32.totalorder %s20, 0
      %p89 = por %p87, %p88
      %s90 = ssub.s32 %s21, %s33
      %s91 = ssub.s32 %s22, %s29
      %s92 = sor.u32 %s90, %s91
      %p93 = scmp.eq.s32.totalorder %s92, 0
      %s95 = sadd.s32 %s94, 1
      %s96 = scalar_select %p93, %s94, %s95
      %p99 = pneg %p93
      %p100 = scmp.eq.s32.totalorder %s14, 7
      %p101 = por %p99, %p100
      %p102 = scmp.ne.s32.totalorder %s94, %s97
      %p103 = scmp.eq.s32.totalorder %s14, 0
      %p104 = por %p102, %p103
      %p105 = scmp.ne.s32.totalorder %s94, %s97
      %p106 = scmp.eq.s32.totalorder %s19, 7
      %p107 = por %p105, %p106
      %p108 = scmp.ne.s32.totalorder %s97, %s98
      %p109 = scmp.eq.s32.totalorder %s19, 0
      %p110 = por %p108, %p109
      %p111 = scmp.ne.s32.totalorder %s97, %s98
      %p112 = scmp.eq.s32.totalorder %s20, 7
      %p113 = por %p111, %p112
      %p115 = scmp.ne.s32.totalorder %s98, %s114
      %p116 = scmp.eq.s32.totalorder %s20, 0
      %p117 = por %p115, %p116
      %s118 = ssub.s32 %s21, %s33
      %s119 = ssub.s32 %s22, %s29
      %s120 = sor.u32 %s118, %s119
      %p121 = scmp.eq.s32.totalorder %s120, 0
      %s123 = sadd.s32 %s122, 1
      %s124 = scalar_select %p121, %s122, %s123
      %p127 = pneg %p121
      %p128 = scmp.eq.s32.totalorder %s14, 7
      %p129 = por %p127, %p128
      %p130 = scmp.ne.s32.totalorder %s122, %s125
      %p131 = scmp.eq.s32.totalorder %s14, 0
      %p132 = por %p130, %p131
      %p133 = scmp.ne.s32.totalorder %s122, %s125
      %p134 = scmp.eq.s32.totalorder %s19, 7
      %p135 = por %p133, %p134
      %p136 = scmp.ne.s32.totalorder %s125, %s126
      %p137 = scmp.eq.s32.totalorder %s19, 0
      %p138 = por %p136, %p137
      %p139 = scmp.ne.s32.totalorder %s125, %s126
      %p140 = scmp.eq.s32.totalorder %s20, 7
      %p141 = por %p139, %p140
      %p143 = scmp.ne.s32.totalorder %s126, %s142
      %p144 = scmp.eq.s32.totalorder %s20, 0
      %p145 = por %p143, %p144
      %s146 = ssub.s32 %s21, %s33
      %s147 = ssub.s32 %s22, %s29
      %s148 = sor.u32 %s146, %s147
      %p149 = scmp.eq.s32.totalorder %s148, 0
      %s151 = sadd.s32 %s150, 1
      %s152 = scalar_select %p149, %s150, %s151
      %p155 = pneg %p149
      %p156 = scmp.eq.s32.totalorder %s14, 7
      %p157 = por %p155, %p156
      %p158 = scmp.ne.s32.totalorder %s150, %s153
      %p159 = scmp.eq.s32.totalorder %s14, 0
      %p160 = por %p158, %p159
      %p161 = scmp.ne.s32.totalorder %s150, %s153
      %p162 = scmp.eq.s32.totalorder %s19, 7
      %p163 = por %p161, %p162
      %p164 = scmp.ne.s32.totalorder %s153, %s154
      %p165 = scmp.eq.s32.totalorder %s19, 0
      %p166 = por %p164, %p165
      %p167 = scmp.ne.s32.totalorder %s153, %s154
      %p168 = scmp.eq.s32.totalorder %s20, 7
      %p169 = por %p167, %p168
      %p171 = scmp.ne.s32.totalorder %s154, %s170
      %p172 = scmp.eq.s32.totalorder %s20, 0
      %p173 = por %p171, %p172
      %p174 = scmp.le.s32.totalorder 1, %s14
      %p175 = scmp.lt.s32.totalorder %s14, 9
      %p176 = pnand %p174, %p175
      %p177 = pneg %p176
      // Predicated region
      $region9: #{encoder_layer_forward.4} parent=5 // pred_check
        _
      $region10: #{encoder_layer_forward.4} parent=5 // pred_check_branch
        %179 = sbr.rel (%p176) target = $region12
      $region11: #{encoder_layer_forward.4} parent=5 // pred_region
        %s180 = ssub.s32 %s14, 1
      $region12: #{encoder_layer_forward.4} parent=5 // pred_fallthru
        _
      %p181 = scmp.lt.s32.totalorder %s14, 8
      // Predicated region
      $region13: #{encoder_layer_forward.4} parent=5 // pred_check
        %p182 = pneg %p181
      $region14: #{encoder_layer_forward.4} parent=5 // pred_check_branch
        %184 = sbr.rel (%p182) target = $region16
      $region15: #{encoder_layer_forward.4} parent=5 // pred_region
        // Predicated region
        $region17: #{encoder_layer_forward.4} parent=15 // pred_check
          %p185 = pneg %p48
        $region18: #{encoder_layer_forward.4} parent=15 // pred_check_branch
          %187 = sbr.rel (%p185) target = $region20
        $region19: #{encoder_layer_forward.4} parent=15 // pred_region
          %p188 = scmp.lt.s32.totalorder %s21, 1
          %s189 = scalar_select %p188, %s21, 1
          %p190 = scmp.lt.s32.totalorder %s22, 3
          %s191 = scalar_select %p190, %s22, 3
          %s192 = smul.addr %s189, 4
          %s193 = sadd.s32 %s191, %s192
          %s194 = smul.addr %s193, 4
          %s195 = scalar_lea.vmem %s0, %s194
        $region20: #{encoder_layer_forward.4} parent=15 // pred_fallthru
          _
        // Predicated region
        $region21: #{encoder_layer_forward.4} parent=15 // pred_check
          %p196 = pneg %p76
        $region22: #{encoder_layer_forward.4} parent=15 // pred_check_branch
          %198 = sbr.rel (%p196) target = $region24
        $region23: #{encoder_layer_forward.4} parent=15 // pred_region
          %p199 = scmp.lt.s32.totalorder %s21, 1
          %s200 = scalar_select %p199, %s21, 1
          %p201 = scmp.lt.s32.totalorder %s22, 3
          %s202 = scalar_select %p201, %s22, 3
          %s203 = smul.addr %s200, 4
          %s204 = sadd.s32 %s202, %s203
          %s205 = smul.addr %s204, 4
          %s206 = scalar_lea.vmem %s1, %s205
        $region24: #{encoder_layer_forward.4} parent=15 // pred_fallthru
          _
        // Predicated region
        $region25: #{encoder_layer_forward.4} parent=15 // pred_check
          %p207 = pneg %p104
        $region26: #{encoder_layer_forward.4} parent=15 // pred_check_branch
          %209 = sbr.rel (%p207) target = $region28
        $region27: #{encoder_layer_forward.4} parent=15 // pred_region
          %p210 = scmp.lt.s32.totalorder %s21, 1
          %s211 = scalar_select %p210, %s21, 1
          %p212 = scmp.lt.s32.totalorder %s22, 3
          %s213 = scalar_select %p212, %s22, 3
          %s214 = smul.addr %s211, 4
          %s215 = sadd.s32 %s213, %s214
          %s216 = smul.addr %s215, 4
          %s217 = scalar_lea.vmem %s2, %s216
        $region28: #{encoder_layer_forward.4} parent=15 // pred_fallthru
          _
      $region16: #{encoder_layer_forward.4} parent=5 // pred_fallthru
        _
      %p218 = scmp.le.s32.totalorder 1, %s14
      %p219 = scmp.lt.s32.totalorder %s14, 9
      %p220 = pnand %p218, %p219
      %p221 = pneg %p220
      // Predicated region
      $region29: #{encoder_layer_forward.4} parent=5 // pred_check
        _
      $region30: #{encoder_layer_forward.4} parent=5 // pred_check_branch
        %223 = sbr.rel (%p220) target = $region32
      $region31: #{encoder_layer_forward.4} parent=5 // pred_region
        %s224 = ssub.s32 %s14, 1
        %p225 = scmp.lt.s32.totalorder %s23, 1
        %s226 = scalar_select %p225, %s23, 1
        %p227 = scmp.lt.s32.totalorder %s24, 3
        %s228 = scalar_select %p227, %s24, 3
        %s229 = smul.addr %s226, 4
        %s230 = sadd.s32 %s228, %s229
        %s231 = smul.addr %s230, 4
        %s232 = scalar_lea.vmem %s0, %s231
        %p233 = pneg %p54
        %p234 = pneg %p51
        %p235 = scmp.lt.s32.totalorder %s23, 1
        %s236 = scalar_select %p235, %s23, 1
        %p237 = scmp.lt.s32.totalorder %s24, 3
        %s238 = scalar_select %p237, %s24, 3
        %s239 = smul.addr %s236, 4
        %s240 = sadd.s32 %s238, %s239
        %s241 = smul.addr %s240, 4
        %s242 = scalar_lea.vmem %s1, %s241
        %p243 = pneg %p82
        %p244 = pneg %p79
        %p245 = scmp.lt.s32.totalorder %s23, 1
        %s246 = scalar_select %p245, %s23, 1
        %p247 = scmp.lt.s32.totalorder %s24, 3
        %s248 = scalar_select %p247, %s24, 3
        %s249 = smul.addr %s246, 4
        %s250 = sadd.s32 %s248, %s249
        %s251 = smul.addr %s250, 4
        %s252 = scalar_lea.vmem %s2, %s251
        %p253 = pneg %p110
        %p254 = pneg %p107
        %p255 = pneg %p138
        %p256 = pneg %p135
        %p257 = scmp.lt.s32.totalorder %s23, 1
        %s258 = scalar_select %p257, %s23, 1
        %p259 = scmp.lt.s32.totalorder %s24, 3
        %s260 = scalar_select %p259, %s24, 3
        %s261 = smul.addr %s258, 4
        %s262 = sadd.s32 %s260, %s261
        %s263 = smul.addr %s262, 4
        %s264 = scalar_lea.vmem %s3, %s263
        %p265 = pneg %p166
        %p266 = pneg %p163
        %s267 = sand.u32 %s153, 1
        %s268 = scalar_lea.sflag [#allocation3], %s267
        %s269 = sand.u32 %s153, 1
        %s270 = smul.addr %s269, 4
        %s271 = scalar_lea.vmem [#allocation2], %s270
        %p272 = scmp.lt.s32.totalorder %s23, 1
        %s273 = scalar_select %p272, %s23, 1
        %p274 = scmp.lt.s32.totalorder %s24, 3
        %s275 = scalar_select %p274, %s24, 3
        %s276 = smul.addr %s273, 4
        %s277 = sadd.s32 %s275, %s276
        %s278 = smul.addr %s277, 4
        %s279 = scalar_lea.vmem %s0, %s278
        %p280 = scmp.lt.s32.totalorder %s23, 1
        %s281 = scalar_select %p280, %s23, 1
        %p282 = scmp.lt.s32.totalorder %s24, 3
        %s283 = scalar_select %p282, %s24, 3
        %s284 = smul.addr %s281, 4
        %s285 = sadd.s32 %s283, %s284
        %s286 = smul.addr %s285, 4
        %s287 = scalar_lea.vmem %s1, %s286
        %p288 = scmp.lt.s32.totalorder %s23, 1
        %s289 = scalar_select %p288, %s23, 1
        %p290 = scmp.lt.s32.totalorder %s24, 3
        %s291 = scalar_select %p290, %s24, 3
        %s292 = smul.addr %s289, 4
        %s293 = sadd.s32 %s291, %s292
        %s294 = smul.addr %s293, 4
        %s295 = scalar_lea.vmem %s2, %s294
        %p296 = scmp.lt.s32.totalorder %s23, 1
        %s297 = scalar_select %p296, %s23, 1
        %p298 = scmp.lt.s32.totalorder %s24, 3
        %s299 = scalar_select %p298, %s24, 3
        %s300 = smul.addr %s297, 4
        %s301 = sadd.s32 %s299, %s300
        %s302 = smul.addr %s301, 4
        %s303 = scalar_lea.vmem %s3, %s302
        %v306 = vld [vmem:[%s279] sm:$0xf]
        %v307 = vmul.bf16 %v306, 1052065461
        %v308 = vld [vmem:[%s287] sm:$0xf]
        %v309 = vld [vmem:[%s295] sm:$0xf]
        %vm310 = vcmask 64512
        %v312 = vsel %vm310, %v307, 0
        %v315 = vsel %vm310, %v308, 0
        %317 = vmatprep.subr.bf16.mxu0 0
        %318 = vmatpush1.bf16.xpose.msra.mxu0 0
        %319 = vmatprep.subr.bf16.mxu0 0
        %320 = vmatpush1.bf16.xpose.msra.mxu0 0
        %321 = vmatprep.subr.bf16.mxu0 0
        %322 = vmatpush1.bf16.xpose.msra.mxu0 0
        %323 = vmatprep.subr.bf16.mxu0 0
        %324 = vmatpush1.bf16.xpose.msra.mxu0 0
        %325 = vmatprep.subr.bf16.mxu0 0
        %326 = vmatpush1.bf16.xpose.msra.mxu0 0
        %327 = vmatprep.subr.bf16.mxu0 0
        %328 = vmatpush1.bf16.xpose.msra.mxu0 0
        %329 = vmatprep.subr.bf16.mxu0 0
        %330 = vmatpush1.bf16.xpose.msra.mxu0 0
        %331 = vmatprep.subr.bf16.mxu0 0
        %332 = vmatpush1.bf16.xpose.msra.mxu0 %v315
        %333 = vmatprep.subr.bf16.mxu0 0
        %334 = vmatpush2.bf16.xpose.msra.mxu0 0
        %335 = vmatprep.subr.bf16.mxu0 0
        %336 = vmatpush2.bf16.xpose.msra.mxu0 0
        %337 = vmatprep.subr.bf16.mxu0 0
        %338 = vmatpush2.bf16.xpose.msra.mxu0 0
        %339 = vmatprep.subr.bf16.mxu0 0
        %340 = vmatpush2.bf16.xpose.msra.mxu0 0
        %341 = vmatprep.subr.bf16.mxu0 0
        %342 = vmatpush2.bf16.xpose.msra.mxu0 0
        %343 = vmatprep.subr.bf16.mxu0 0
        %344 = vmatpush2.bf16.xpose.msra.mxu0 0
        %345 = vmatprep.subr.bf16.mxu0 0
        %346 = vmatpush2.bf16.xpose.msra.mxu0 0
        %347 = vmatprep.subr.bf16.mxu0 0
        %348 = vmatpush2.bf16.xpose.msra.mxu0 0
        %349 = vmatprep.mubr.bf16.mxu0 0
        %350 = vmatmul.mubr.bf16.gmra.mxu0 %v312
        %v351 = vpop.f32.mrf.mxu0
        %v352 = vadd.f32 0.0, %v351
        %v353 = vpop.f32.mrf.mxu0
        %v354 = vpop.f32.mrf.mxu0
        %v355 = vpop.f32.mrf.mxu0
        %356 = vdwg.mxu0
        %v357 = vsel %vm310, %v352, -inf
        %358 = vmax.xlane.f32.xlu0 %v357
        %v359 = vpop.xlane.xlu0 %358
        %v360 = vsub.f32 %v352, %v359
        %v361 = vmul.f32 %v360, 1.442695
        %v362 = vpow.pop %v361
        %v363 = vsel %vm310, %v362, 0.0
        %364 = vadd.xlane.f32.xlu0 %v363
        %v365 = vpop.xlane.xlu0 %364
        %v366 = vrcp.pop %v365
        %v367 = vmul.f32 %v362, %v366
        %v368 = vpack.c.bf16 %v367, %v367
        %v370 = vsel %vm310, %v368, 0
        %vm372 = vcmask 1043456
        %v374 = vsel %vm372, %v309, 0
        %376 = vmatprep.subr.bf16.mxu0 0
        %377 = vmatpush1.bf16.msra.mxu0 0
        %378 = vmatprep.subr.bf16.mxu0 0
        %379 = vmatpush1.bf16.msra.mxu0 0
        %380 = vmatprep.subr.bf16.mxu0 0
        %381 = vmatpush1.bf16.msra.mxu0 0
        %382 = vmatprep.subr.bf16.mxu0 0
        %383 = vmatpush1.bf16.msra.mxu0 0
        %384 = vmatprep.subr.bf16.mxu0 0
        %385 = vmatpush1.bf16.msra.mxu0 0
        %386 = vmatprep.subr.bf16.mxu0 0
        %387 = vmatpush1.bf16.msra.mxu0 0
        %388 = vmatprep.subr.bf16.mxu0 0
        %389 = vmatpush1.bf16.msra.mxu0 0
        %390 = vmatprep.subr.bf16.mxu0 0
        %391 = vmatpush1.bf16.msra.mxu0 %v374
        %392 = vmatprep.subr.bf16.mxu0 0
        %393 = vmatpush2.bf16.msra.mxu0 0
        %394 = vmatprep.subr.bf16.mxu0 0
        %395 = vmatpush2.bf16.msra.mxu0 0
        %396 = vmatprep.subr.bf16.mxu0 0
        %397 = vmatpush2.bf16.msra.mxu0 0
        %398 = vmatprep.subr.bf16.mxu0 0
        %399 = vmatpush2.bf16.msra.mxu0 0
        %400 = vmatprep.subr.bf16.mxu0 0
        %401 = vmatpush2.bf16.msra.mxu0 0
        %402 = vmatprep.subr.bf16.mxu0 0
        %403 = vmatpush2.bf16.msra.mxu0 0
        %404 = vmatprep.subr.bf16.mxu0 0
        %405 = vmatpush2.bf16.msra.mxu0 0
        %406 = vmatprep.subr.bf16.mxu0 0
        %407 = vmatpush2.bf16.msra.mxu0 0
        %408 = vmatprep.mubr.bf16.mxu0 0
        %409 = vmatmul.mubr.bf16.gmra.mxu0 %v370
        %v410 = vpop.f32.mrf.mxu0
        %v411 = vadd.f32 0.0, %v410
        %v412 = vpop.f32.mrf.mxu0
        %v413 = vpop.f32.mrf.mxu0
        %v414 = vpop.f32.mrf.mxu0
        %415 = vdwg.mxu0
        %vm416 = vcmask 60416
        %417 = vst.msk [vmem:[%s271] sm:$0xf] %vm416, %v368
        %v418 = vpack.c.bf16 %v411, %v411
        %419 = vst.msk [vmem:[%s303] sm:$0xf] %vm416, %v418
        %p420 = scmp.lt.s32.totalorder %s23, 1
        %s421 = scalar_select %p420, %s23, 1
        %p422 = scmp.lt.s32.totalorder %s24, 3
        %s423 = scalar_select %p422, %s24, 3
        %s424 = smul.addr %s421, 4
        %s425 = sadd.s32 %s423, %s424
        %s426 = smul.addr %s425, 4
        %s427 = scalar_lea.vmem %s3, %s426
        %s428 = sand.u32 %s153, 1
        %s429 = scalar_lea.sflag [#allocation3], %s428
        %s430 = sand.u32 %s153, 1
        %s431 = smul.addr %s430, 4
        %s432 = scalar_lea.vmem [#allocation2], %s431
        // Predicated region
        $region33: #{encoder_layer_forward.4} parent=31 // pred_check
          %p433 = pneg %p135
        $region34: #{encoder_layer_forward.4} parent=31 // pred_check_branch
          %435 = sbr.rel (%p433) target = $region36
        $region35: #{encoder_layer_forward.4} parent=31 // pred_region
          _
        $region36: #{encoder_layer_forward.4} parent=31 // pred_fallthru
          _
        // Predicated region
        $region37: #{encoder_layer_forward.4} parent=31 // pred_check
          %p436 = pneg %p163
        $region38: #{encoder_layer_forward.4} parent=31 // pred_check_branch
          %438 = sbr.rel (%p436) target = $region40
        $region39: #{encoder_layer_forward.4} parent=31 // pred_region
          %s440 = ssub.s32 64, 64
          %441 = vsyncadd %s429, %s440
          %s442 = smul.addr %s23, 4
          %s443 = sadd.s32 %s24, %s442
          %s444 = smul.addr %s443, 64
          %s445 = scalar_lea.hbm %s4, %s444
          %s447 = sshll.u32 %s432, 4
          %s448 = int_to_ptr.vmem [resolvable:$true] %s447
          %450 = dma.vmem_to_hbm [thread:$0]  %s448, 64, %s445, %s429
        $region40: #{encoder_layer_forward.4} parent=31 // pred_fallthru
          _
      $region32: #{encoder_layer_forward.4} parent=5 // pred_fallthru
        _
      %p451 = scmp.le.s32.totalorder 2, %s14
      // Predicated region
      $region41: #{encoder_layer_forward.4} parent=5 // pred_check
        %p452 = pneg %p451
      $region42: #{encoder_layer_forward.4} parent=5 // pred_check_branch
        %454 = sbr.rel (%p452) target = $region44
      $region43: #{encoder_layer_forward.4} parent=5 // pred_region
        %s455 = ssub.s32 %s14, 2
        // Predicated region
        $region45: #{encoder_layer_forward.4} parent=43 // pred_check
          %p456 = pneg %p141
        $region46: #{encoder_layer_forward.4} parent=43 // pred_check_branch
          %458 = sbr.rel (%p456) target = $region48
        $region47: #{encoder_layer_forward.4} parent=43 // pred_region
          %p459 = scmp.lt.s32.totalorder %s25, 1
          %s460 = scalar_select %p459, %s25, 1
          %p461 = scmp.lt.s32.totalorder %s26, 3
          %s462 = scalar_select %p461, %s26, 3
          %s463 = smul.addr %s460, 4
          %s464 = sadd.s32 %s462, %s463
          %s465 = smul.addr %s464, 4
          %s466 = scalar_lea.vmem %s3, %s465
        $region48: #{encoder_layer_forward.4} parent=43 // pred_fallthru
          _
        // Predicated region
        $region49: #{encoder_layer_forward.4} parent=43 // pred_check
          %p467 = pneg %p169
        $region50: #{encoder_layer_forward.4} parent=43 // pred_check_branch
          %469 = sbr.rel (%p467) target = $region52
        $region51: #{encoder_layer_forward.4} parent=43 // pred_region
          %s470 = sand.u32 %s154, 1
          %s471 = scalar_lea.sflag [#allocation3], %s470
          %s472 = sand.u32 %s154, 1
          %s473 = smul.addr %s472, 4
          %s474 = scalar_lea.vmem [#allocation2], %s473
          %475 = dma.done %s471, 64
        $region52: #{encoder_layer_forward.4} parent=43 // pred_fallthru
          _
      $region44: #{encoder_layer_forward.4} parent=5 // pred_fallthru
        _
    $region6: #{encoder_layer_forward.4} parent=1 // loop_footer
      %s18 = sadd.s32 1, %s14
    $region7: #{encoder_layer_forward.4} parent=1 // loop_footer_branch
      %13 = sbr.rel target = $region3
    $region8: #{encoder_layer_forward.4} parent=1 // loop_exit
      _
    %476 = vsyncpa [#allocation3], 1
    %s477 = scalar_lea.sflag [#allocation3], 1
    %478 = vsyncpa %s477, 1

// kernel: encoder_layer_forward.5
$region0: #{encoder_layer_forward.5}
  #allocation0 [shape = 'u32[]', space=smem, size = 0x4, offset = 0x4, fixed_abs, tag = 'smem constant byte address 0x4 - core index']
  #allocation1 [shape = 'u32[144,128]{1,0:T(1,128)}', space=vmem, size = 0x12000, scoped, tag = 'internal scratch']
  %s0 = inlined_call_operand.vmem [shape: bf16[16,32], index: 0, kind: input, shape index: {}]
  %s1 = inlined_call_operand.vmem [shape: f32[16,32], index: 1, kind: input, shape index: {}]
  %s2 = inlined_call_operand.vmem [shape: bf16[32,32], index: 2, kind: input, shape index: {}]
  %s3 = inlined_call_operand.vmem [shape: f32[1,32], index: 3, kind: input, shape index: {}]
  %s4 = inlined_call_operand.vmem [shape: bf16[32,128], index: 4, kind: input, shape index: {}]
  %s5 = inlined_call_operand.vmem [shape: f32[1,128], index: 5, kind: input, shape index: {}]
  %s6 = inlined_call_operand.vmem [shape: bf16[128,32], index: 6, kind: input, shape index: {}]
  %s7 = inlined_call_operand.vmem [shape: f32[1,32], index: 7, kind: input, shape index: {}]
  %s8 = inlined_call_operand.vmem [shape: f32[1,32], index: 8, kind: input, shape index: {}]
  %s9 = inlined_call_operand.vmem [shape: f32[1,32], index: 9, kind: input, shape index: {}]
  %s10 = inlined_call_operand.vmem [shape: f32[1,32], index: 10, kind: input, shape index: {}]
  %s11 = inlined_call_operand.vmem [shape: f32[1,32], index: 11, kind: input, shape index: {}]
  %s12 = inlined_call_operand.hbm [shape: f32[16,32], index: 12, kind: output, shape index: {}]
  %s13 = sld [smem:[#allocation0]]
  $region58: #{encoder_layer_forward.5} parent=0
    _
  %s15 = ssub.s32 1, %s13
  %s16 = scalar_select 0, %s15, %s13
  $region1: #{encoder_layer_forward.5} parent=0
    #allocation2 [shape = 'u8[8192]{0}', space=vmem, size = 0x2000, scoped, tag = 'output window, operand 0, single buffered']
    #allocation3 [shape = 's32[1]{0}', space=sflag, size = 0x4, scoped, tag = 'scoped memory for encoder_layer_forward.5']
    %17 = vsyncpa [#allocation3], 0
    // Predicated region
    $region2: #{encoder_layer_forward.5} parent=1 // pred_check
      _
    $region3: #{encoder_layer_forward.5} parent=1 // pred_check_branch
      %19 = sbr.rel (0) target = $region5
    $region4: #{encoder_layer_forward.5} parent=1 // pred_region
      _
    $region5: #{encoder_layer_forward.5} parent=1 // pred_fallthru
      _
    // Predicated region
    $region6: #{encoder_layer_forward.5} parent=1 // pred_check
      _
    $region7: #{encoder_layer_forward.5} parent=1 // pred_check_branch
      %21 = sbr.rel (0) target = $region9
    $region8: #{encoder_layer_forward.5} parent=1 // pred_region
      _
    $region9: #{encoder_layer_forward.5} parent=1 // pred_fallthru
      _
    // Predicated region
    $region10: #{encoder_layer_forward.5} parent=1 // pred_check
      _
    $region11: #{encoder_layer_forward.5} parent=1 // pred_check_branch
      %23 = sbr.rel (0) target = $region13
    $region12: #{encoder_layer_forward.5} parent=1 // pred_region
      _
    $region13: #{encoder_layer_forward.5} parent=1 // pred_fallthru
      _
    // Predicated region
    $region14: #{encoder_layer_forward.5} parent=1 // pred_check
      _
    $region15: #{encoder_layer_forward.5} parent=1 // pred_check_branch
      %25 = sbr.rel (0) target = $region17
    $region16: #{encoder_layer_forward.5} parent=1 // pred_region
      _
    $region17: #{encoder_layer_forward.5} parent=1 // pred_fallthru
      _
    // Predicated region
    $region18: #{encoder_layer_forward.5} parent=1 // pred_check
      _
    $region19: #{encoder_layer_forward.5} parent=1 // pred_check_branch
      %27 = sbr.rel (0) target = $region21
    $region20: #{encoder_layer_forward.5} parent=1 // pred_region
      _
    $region21: #{encoder_layer_forward.5} parent=1 // pred_fallthru
      _
    // Predicated region
    $region22: #{encoder_layer_forward.5} parent=1 // pred_check
      _
    $region23: #{encoder_layer_forward.5} parent=1 // pred_check_branch
      %29 = sbr.rel (0) target = $region25
    $region24: #{encoder_layer_forward.5} parent=1 // pred_region
      _
    $region25: #{encoder_layer_forward.5} parent=1 // pred_fallthru
      _
    // Predicated region
    $region26: #{encoder_layer_forward.5} parent=1 // pred_check
      _
    $region27: #{encoder_layer_forward.5} parent=1 // pred_check_branch
      %31 = sbr.rel (0) target = $region29
    $region28: #{encoder_layer_forward.5} parent=1 // pred_region
      _
    $region29: #{encoder_layer_forward.5} parent=1 // pred_fallthru
      _
    // Predicated region
    $region30: #{encoder_layer_forward.5} parent=1 // pred_check
      _
    $region31: #{encoder_layer_forward.5} parent=1 // pred_check_branch
      %33 = sbr.rel (0) target = $region33
    $region32: #{encoder_layer_forward.5} parent=1 // pred_region
      _
    $region33: #{encoder_layer_forward.5} parent=1 // pred_fallthru
      _
    // Predicated region
    $region34: #{encoder_layer_forward.5} parent=1 // pred_check
      _
    $region35: #{encoder_layer_forward.5} parent=1 // pred_check_branch
      %35 = sbr.rel (0) target = $region37
    $region36: #{encoder_layer_forward.5} parent=1 // pred_region
      _
    $region37: #{encoder_layer_forward.5} parent=1 // pred_fallthru
      _
    // Predicated region
    $region38: #{encoder_layer_forward.5} parent=1 // pred_check
      _
    $region39: #{encoder_layer_forward.5} parent=1 // pred_check_branch
      %37 = sbr.rel (0) target = $region41
    $region40: #{encoder_layer_forward.5} parent=1 // pred_region
      _
    $region41: #{encoder_layer_forward.5} parent=1 // pred_fallthru
      _
    // Predicated region
    $region42: #{encoder_layer_forward.5} parent=1 // pred_check
      _
    $region43: #{encoder_layer_forward.5} parent=1 // pred_check_branch
      %39 = sbr.rel (0) target = $region45
    $region44: #{encoder_layer_forward.5} parent=1 // pred_region
      _
    $region45: #{encoder_layer_forward.5} parent=1 // pred_fallthru
      _
    // Predicated region
    $region46: #{encoder_layer_forward.5} parent=1 // pred_check
      _
    $region47: #{encoder_layer_forward.5} parent=1 // pred_check_branch
      %41 = sbr.rel (0) target = $region49
    $region48: #{encoder_layer_forward.5} parent=1 // pred_region
      _
    $region49: #{encoder_layer_forward.5} parent=1 // pred_fallthru
      _
    %v43 = vld [vmem:[%s0] sm:$0xf]
    %v44 = vld [vmem:[%s0 + $0x4] sm:$0xf]
    %v45 = vld [vmem:[%s1] sm:$0xff]
    %v46 = vld [vmem:[%s1 + $0x8] sm:$0xff]
    %v47 = vld [vmem:[%s2] sm:$0xf]
    %v48 = vld [vmem:[%s2 + $0x4] sm:$0xf]
    %v49 = vld [vmem:[%s2 + $0x8] sm:$0xf]
    %v50 = vld [vmem:[%s2 + $0xc] sm:$0xf]
    %v51 = vld [vmem:[%s3] sm:$0x1]
    %v53 = vlaneseq
    %v54 = vshrl.u32 %v53, 7
    %v55 = vsub.s32 0, %v54
    %v56 = vrot.slane %v51, %v55
    %v60 = vunpack.c.l.b16 %v43
    %v61 = vunpack.c.l.b16 %v44
    %v62 = vpack.c.b16 %v61, %v60
    %v67 = vunpack.c.l.b16 %v47
    %v68 = vunpack.c.l.b16 %v48
    %v69 = vunpack.c.l.b16 %v49
    %v70 = vunpack.c.l.b16 %v50
    %v71 = vpack.c.b16 %v68, %v67
    %v72 = vpack.c.b16 %v70, %v69
    %vm75 = vcmask 261120
    %v77 = vsel %vm75, %v62, 0
    %79 = vmatprep.subr.bf16.mxu0 0
    %80 = vmatpush1.bf16.msra.mxu0 0
    %81 = vmatprep.subr.bf16.mxu0 0
    %82 = vmatpush1.bf16.msra.mxu0 0
    %83 = vmatprep.subr.bf16.mxu0 0
    %84 = vmatpush1.bf16.msra.mxu0 0
    %85 = vmatprep.subr.bf16.mxu0 0
    %86 = vmatpush1.bf16.msra.mxu0 0
    %87 = vmatprep.subr.bf16.mxu0 0
    %88 = vmatpush1.bf16.msra.mxu0 0
    %89 = vmatprep.subr.bf16.mxu0 0
    %90 = vmatpush1.bf16.msra.mxu0 0
    %91 = vmatprep.subr.bf16.mxu0 0
    %92 = vmatpush1.bf16.msra.mxu0 %v72
    %93 = vmatprep.subr.bf16.mxu0 0
    %94 = vmatpush1.bf16.msra.mxu0 %v71
    %95 = vmatprep.subr.bf16.mxu0 0
    %96 = vmatpush2.bf16.msra.mxu0 0
    %97 = vmatprep.subr.bf16.mxu0 0
    %98 = vmatpush2.bf16.msra.mxu0 0
    %99 = vmatprep.subr.bf16.mxu0 0
    %100 = vmatpush2.bf16.msra.mxu0 0
    %101 = vmatprep.subr.bf16.mxu0 0
    %102 = vmatpush2.bf16.msra.mxu0 0
    %103 = vmatprep.subr.bf16.mxu0 0
    %104 = vmatpush2.bf16.msra.mxu0 0
    %105 = vmatprep.subr.bf16.mxu0 0
    %106 = vmatpush2.bf16.msra.mxu0 0
    %107 = vmatprep.subr.bf16.mxu0 0
    %108 = vmatpush2.bf16.msra.mxu0 0
    %109 = vmatprep.subr.bf16.mxu0 0
    %110 = vmatpush2.bf16.msra.mxu0 0
    %111 = vmatprep.mubr.bf16.mxu0 0
    %112 = vmatmul.mubr.bf16.gmra.mxu0 %v77
    %v113 = vpop.f32.mrf.mxu0
    %v114 = vadd.f32 %v56, %v113
    %v115 = vpop.f32.mrf.mxu0
    %v116 = vpop.f32.mrf.mxu0
    %v117 = vadd.f32 %v56, %v116
    %v118 = vpop.f32.mrf.mxu0
    %119 = vdwg.mxu0
    %v120 = vadd.f32 %v45, %v114
    %v121 = vadd.f32 %v46, %v117
    %v122 = vld [vmem:[%s8] sm:$0x1]
    %v123 = vld [vmem:[%s9] sm:$0x1]
    %v124 = vsel %vm75, %v120, 0.0
    %125 = vadd.xlane.f32.xlu0 %v124
    %v126 = vpop.xlane.xlu0 %125
    %v127 = vsel %vm75, %v121, 0.0
    %128 = vadd.xlane.f32.xlu0 %v127
    %v129 = vpop.xlane.xlu0 %128
    %v130 = vrcp.pop 32.0
    %v131 = vmul.f32 %v126, %v130
    %v132 = vmul.f32 %v129, %v130
    %v133 = vsub.f32 %v120, %v131
    %v134 = vsub.f32 %v121, %v132
    %v135 = vmul.f32 %v133, %v133
    %v136 = vmul.f32 %v134, %v134
    %v137 = vsel %vm75, %v135, 0.0
    %138 = vadd.xlane.f32.xlu0 %v137
    %v139 = vpop.xlane.xlu0 %138
    %v140 = vsel %vm75, %v136, 0.0
    %141 = vadd.xlane.f32.xlu0 %v140
    %v142 = vpop.xlane.xlu0 %141
    %v143 = vmul.f32 %v139, %v130
    %v144 = vmul.f32 %v142, %v130
    %v145 = vadd.f32 %v143, 1e-05
    %v146 = vadd.f32 %v144, 1e-05
    %v147 = vrsqrt.pop %v145
    %v148 = vrsqrt.pop %v146
    %v149 = vmul.f32 %v133, %v147
    %v150 = vmul.f32 %v134, %v148
    %v152 = vlaneseq
    %v153 = vshrl.u32 %v152, 7
    %v154 = vsub.s32 0, %v153
    %v155 = vrot.slane %v122, %v154
    %v157 = vmul.f32 %v149, %v155
    %v158 = vmul.f32 %v150, %v155
    %v160 = vlaneseq
    %v161 = vshrl.u32 %v160, 7
    %v162 = vsub.s32 0, %v161
    %v163 = vrot.slane %v123, %v162
    %v165 = vadd.f32 %v157, %v163
    %v166 = vadd.f32 %v158, %v163
    %v167 = vpack.c.bf16 %v166, %v165
    %v168 = vld [vmem:[%s4] sm:$0xf]
    %v169 = vld [vmem:[%s4 + $0x4] sm:$0xf]
    %v170 = vld [vmem:[%s4 + $0x8] sm:$0xf]
    %v171 = vld [vmem:[%s4 + $0xc] sm:$0xf]
    %v172 = vld [vmem:[%s5] sm:$0x1]
    %v174 = vlaneseq
    %v175 = vshrl.u32 %v174, 7
    %v176 = vsub.s32 0, %v175
    %v177 = vrot.slane %v172, %v176
    %v183 = vunpack.c.l.b16 %v168
    %v184 = vunpack.c.l.b16 %v169
    %v185 = vunpack.c.l.b16 %v170
    %v186 = vunpack.c.l.b16 %v171
    %v187 = vpack.c.b16 %v184, %v183
    %v188 = vpack.c.b16 %v186, %v185
    %v192 = vsel %vm75, %v167, 0
    %194 = vmatprep.subr.bf16.mxu0 0
    %195 = vmatpush1.bf16.msra.mxu0 0
    %196 = vmatprep.subr.bf16.mxu0 0
    %197 = vmatpush1.bf16.msra.mxu0 0
    %198 = vmatprep.subr.bf16.mxu0 0
    %199 = vmatpush1.bf16.msra.mxu0 0
    %200 = vmatprep.subr.bf16.mxu0 0
    %201 = vmatpush1.bf16.msra.mxu0 0
    %202 = vmatprep.subr.bf16.mxu0 0
    %203 = vmatpush1.bf16.msra.mxu0 0
    %204 = vmatprep.subr.bf16.mxu0 0
    %205 = vmatpush1.bf16.msra.mxu0 0
    %206 = vmatprep.subr.bf16.mxu0 0
    %207 = vmatpush1.bf16.msra.mxu0 %v188
    %208 = vmatprep.subr.bf16.mxu0 0
    %209 = vmatpush1.bf16.msra.mxu0 %v187
    %210 = vmatprep.subr.bf16.mxu0 0
    %211 = vmatpush2.bf16.msra.mxu0 0
    %212 = vmatprep.subr.bf16.mxu0 0
    %213 = vmatpush2.bf16.msra.mxu0 0
    %214 = vmatprep.subr.bf16.mxu0 0
    %215 = vmatpush2.bf16.msra.mxu0 0
    %216 = vmatprep.subr.bf16.mxu0 0
    %217 = vmatpush2.bf16.msra.mxu0 0
    %218 = vmatprep.subr.bf16.mxu0 0
    %219 = vmatpush2.bf16.msra.mxu0 0
    %220 = vmatprep.subr.bf16.mxu0 0
    %221 = vmatpush2.bf16.msra.mxu0 0
    %222 = vmatprep.subr.bf16.mxu0 0
    %223 = vmatpush2.bf16.msra.mxu0 0
    %224 = vmatprep.subr.bf16.mxu0 0
    %225 = vmatpush2.bf16.msra.mxu0 0
    %226 = vmatprep.mubr.bf16.mxu0 0
    %227 = vmatmul.mubr.bf16.gmra.mxu0 %v192
    %v228 = vpop.f32.mrf.mxu0
    %v229 = vadd.f32 %v177, %v228
    %v230 = vpop.f32.mrf.mxu0
    %v231 = vpop.f32.mrf.mxu0
    %v232 = vadd.f32 %v177, %v231
    %v233 = vpop.f32.mrf.mxu0
    %234 = vdwg.mxu0
    %v235 = vmax.f32 %v229, 0.0
    %v236 = vmax.f32 %v232, 0.0
    %v237 = vpack.c.bf16 %v236, %v235
    %v238 = vld [vmem:[%s6] sm:$0xf]
    %v239 = vld [vmem:[%s6 + $0x4] sm:$0xf]
    %v240 = vld [vmem:[%s6 + $0x8] sm:$0xf]
    %v241 = vld [vmem:[%s6 + $0xc] sm:$0xf]
    %v242 = vld [vmem:[%s6 + $0x10] sm:$0xf]
    %v243 = vld [vmem:[%s6 + $0x14] sm:$0xf]
    %v244 = vld [vmem:[%s6 + $0x18] sm:$0xf]
    %v245 = vld [vmem:[%s6 + $0x1c] sm:$0xf]
    %v246 = vld [vmem:[%s6 + $0x20] sm:$0xf]
    %v247 = vld [vmem:[%s6 + $0x24] sm:$0xf]
    %v248 = vld [vmem:[%s6 + $0x28] sm:$0xf]
    %v249 = vld [vmem:[%s6 + $0x2c] sm:$0xf]
    %v250 = vld [vmem:[%s6 + $0x30] sm:$0xf]
    %v251 = vld [vmem:[%s6 + $0x34] sm:$0xf]
    %v252 = vld [vmem:[%s6 + $0x38] sm:$0xf]
    %v253 = vld [vmem:[%s6 + $0x3c] sm:$0xf]
    %v254 = vld [vmem:[%s7] sm:$0x1]
    %v256 = vlaneseq
    %v257 = vshrl.u32 %v256, 7
    %v258 = vsub.s32 0, %v257
    %v259 = vrot.slane %v254, %v258
    %v277 = vunpack.c.l.b16 %v238
    %v278 = vunpack.c.l.b16 %v239
    %v279 = vunpack.c.l.b16 %v240
    %v280 = vunpack.c.l.b16 %v241
    %v281 = vunpack.c.l.b16 %v242
    %v282 = vunpack.c.l.b16 %v243
    %v283 = vunpack.c.l.b16 %v244
    %v284 = vunpack.c.l.b16 %v245
    %v285 = vunpack.c.l.b16 %v246
    %v286 = vunpack.c.l.b16 %v247
    %v287 = vunpack.c.l.b16 %v248
    %v288 = vunpack.c.l.b16 %v249
    %v289 = vunpack.c.l.b16 %v250
    %v290 = vunpack.c.l.b16 %v251
    %v291 = vunpack.c.l.b16 %v252
    %v292 = vunpack.c.l.b16 %v253
    %v293 = vpack.c.b16 %v278, %v277
    %v294 = vpack.c.b16 %v280, %v279
    %v295 = vpack.c.b16 %v282, %v281
    %v296 = vpack.c.b16 %v284, %v283
    %v297 = vpack.c.b16 %v286, %v285
    %v298 = vpack.c.b16 %v288, %v287
    %v299 = vpack.c.b16 %v290, %v289
    %v300 = vpack.c.b16 %v292, %v291
    %309 = vmatprep.subr.bf16.mxu0 0
    %310 = vmatpush1.bf16.msra.mxu0 %v300
    %311 = vmatprep.subr.bf16.mxu0 0
    %312 = vmatpush1.bf16.msra.mxu0 %v299
    %313 = vmatprep.subr.bf16.mxu0 0
    %314 = vmatpush1.bf16.msra.mxu0 %v298
    %315 = vmatprep.subr.bf16.mxu0 0
    %316 = vmatpush1.bf16.msra.mxu0 %v297
    %317 = vmatprep.subr.bf16.mxu0 0
    %318 = vmatpush1.bf16.msra.mxu0 %v296
    %319 = vmatprep.subr.bf16.mxu0 0
    %320 = vmatpush1.bf16.msra.mxu0 %v295
    %321 = vmatprep.subr.bf16.mxu0 0
    %322 = vmatpush1.bf16.msra.mxu0 %v294
    %323 = vmatprep.subr.bf16.mxu0 0
    %324 = vmatpush1.bf16.msra.mxu0 %v293
    %325 = vmatprep.subr.bf16.mxu0 0
    %326 = vmatpush2.bf16.msra.mxu0 0
    %327 = vmatprep.subr.bf16.mxu0 0
    %328 = vmatpush2.bf16.msra.mxu0 0
    %329 = vmatprep.subr.bf16.mxu0 0
    %330 = vmatpush2.bf16.msra.mxu0 0
    %331 = vmatprep.subr.bf16.mxu0 0
    %332 = vmatpush2.bf16.msra.mxu0 0
    %333 = vmatprep.subr.bf16.mxu0 0
    %334 = vmatpush2.bf16.msra.mxu0 0
    %335 = vmatprep.subr.bf16.mxu0 0
    %336 = vmatpush2.bf16.msra.mxu0 0
    %337 = vmatprep.subr.bf16.mxu0 0
    %338 = vmatpush2.bf16.msra.mxu0 0
    %339 = vmatprep.subr.bf16.mxu0 0
    %340 = vmatpush2.bf16.msra.mxu0 0
    %341 = vmatprep.mubr.bf16.mxu0 0
    %342 = vmatmul.mubr.bf16.gmra.mxu0 %v237
    %v343 = vpop.f32.mrf.mxu0
    %v344 = vadd.f32 %v259, %v343
    %v345 = vpop.f32.mrf.mxu0
    %v346 = vpop.f32.mrf.mxu0
    %v347 = vadd.f32 %v259, %v346
    %v348 = vpop.f32.mrf.mxu0
    %349 = vdwg.mxu0
    %v350 = vadd.f32 %v165, %v344
    %v351 = vadd.f32 %v166, %v347
    %v352 = vld [vmem:[%s10] sm:$0x1]
    %v353 = vld [vmem:[%s11] sm:$0x1]
    %v354 = vsel %vm75, %v350, 0.0
    %355 = vadd.xlane.f32.xlu0 %v354
    %v356 = vpop.xlane.xlu0 %355
    %v357 = vsel %vm75, %v351, 0.0
    %358 = vadd.xlane.f32.xlu0 %v357
    %v359 = vpop.xlane.xlu0 %358
    %v360 = vmul.f32 %v356, %v130
    %v361 = vmul.f32 %v359, %v130
    %v362 = vsub.f32 %v350, %v360
    %v363 = vsub.f32 %v351, %v361
    %v364 = vmul.f32 %v362, %v362
    %v365 = vmul.f32 %v363, %v363
    %v366 = vsel %vm75, %v364, 0.0
    %367 = vadd.xlane.f32.xlu0 %v366
    %v368 = vpop.xlane.xlu0 %367
    %v369 = vsel %vm75, %v365, 0.0
    %370 = vadd.xlane.f32.xlu0 %v369
    %v371 = vpop.xlane.xlu0 %370
    %v372 = vmul.f32 %v368, %v130
    %v373 = vmul.f32 %v371, %v130
    %v374 = vadd.f32 %v372, 1e-05
    %v375 = vadd.f32 %v373, 1e-05
    %v376 = vrsqrt.pop %v374
    %v377 = vrsqrt.pop %v375
    %v378 = vmul.f32 %v362, %v376
    %v379 = vmul.f32 %v363, %v377
    %v381 = vlaneseq
    %v382 = vshrl.u32 %v381, 7
    %v383 = vsub.s32 0, %v382
    %v384 = vrot.slane %v352, %v383
    %v386 = vmul.f32 %v378, %v384
    %v387 = vmul.f32 %v379, %v384
    %v389 = vlaneseq
    %v390 = vshrl.u32 %v389, 7
    %v391 = vsub.s32 0, %v390
    %v392 = vrot.slane %v353, %v391
    %v394 = vadd.f32 %v386, %v392
    %v395 = vadd.f32 %v387, %v392
    %396 = vst.msk [vmem:[#allocation2] sm:$0xff] %vm75, %v394
    %397 = vst.msk [vmem:[#allocation2 + $0x8] sm:$0xff] %vm75, %v395
    // Predicated region
    $region50: #{encoder_layer_forward.5} parent=1 // pred_check
      _
    $region51: #{encoder_layer_forward.5} parent=1 // pred_check_branch
      %399 = sbr.rel (0) target = $region53
    $region52: #{encoder_layer_forward.5} parent=1 // pred_region
      %s401 = ssub.s32 256, 256
      %402 = vsyncadd [#allocation3], %s401
      %s403 = sshll.u32 [#allocation2], 4
      %s404 = int_to_ptr.vmem [resolvable:$true] %s403
      %409 = dma.vmem_to_hbm [thread:$0]  %s404, 256, %s12, [#allocation3], 128, 128, 8
    $region53: #{encoder_layer_forward.5} parent=1 // pred_fallthru
      _
    // Predicated region
    $region54: #{encoder_layer_forward.5} parent=1 // pred_check
      _
    $region55: #{encoder_layer_forward.5} parent=1 // pred_check_branch
      %411 = sbr.rel (0) target = $region57
    $region56: #{encoder_layer_forward.5} parent=1 // pred_region
      %412 = dma.done [#allocation3], 256
    $region57: #{encoder_layer_forward.5} parent=1 // pred_fallthru
      _
    %413 = vsyncpa [#allocation3], 1

</llo_original>
